<compile_context>
chip_gen: v6e
topology: v6e:2x2x1
jax: 0.10.0
libtpu: 0.0.40
codegen_flags: <defaults>
</compile_context>

<pallas_src>
import jax
import jax.numpy as jnp
import numpy as np
from jax import lax
from jax.experimental import pallas as pl
from jax.experimental.pallas import tpu as pltpu


def _vmem_limit_bytes():
    """3/4 of this generation's physical VMEM (48 MiB v7x, 96 MiB v5e/v6e)."""
    try:
        cap = int(pltpu.get_tpu_info().vmem_capacity_bytes)
    except Exception:
        cap = 64 << 20
    return max(32 << 20, cap * 3 // 4)


def _make_patcher_kernel(C_in, C_mid, F, L, mxu_dtype):
    f32 = jnp.float32
    eps = 1e-5
    inv_n1 = 1.0 / (C_in * L)      # GroupNorm(groups=1) element count, block1
    inv_n2 = 1.0 / (C_mid * L)     # block2
    o1 = 3 * C_in                  # offsets into the packed weight slab

    def kernel(x_ref, m_ref, gn1_ref, cv_ref, wp_ref, wss_ref, o_ref):
        # per-sample tiles: x (C_in, L), m (F, 1)
        x = x_ref[...].astype(f32)
        m = m_ref[...].astype(f32)

        # ---- unpack parameters (tiny static slices of packed arrays) ----
        gn1 = gn1_ref[...]                                    # (C_in, 2)
        g1, be1 = gn1[:, 0:1], gn1[:, 1:2]
        cv = cv_ref[...]                                      # (C_mid, 7)
        b1, g2, be2 = cv[:, 0:1], cv[:, 1:2], cv[:, 2:3]
        b2, bo = cv[:, 3:4], cv[:, 4:5]
        ssb_scale, ssb_shift = cv[:, 5:6], cv[:, 6:7]
        wp = wp_ref[...]                                      # (C_mid, 3C_in+3C_mid+C_in), mxu_dtype
        w1_taps = (wp[:, 0:C_in], wp[:, C_in:2 * C_in], wp[:, 2 * C_in:o1])
        w2_taps = (wp[:, o1:o1 + C_mid],
                   wp[:, o1 + C_mid:o1 + 2 * C_mid],
                   wp[:, o1 + 2 * C_mid:o1 + 3 * C_mid])
        wo = wp[:, o1 + 3 * C_mid:]

        # per-sample conv boundary masks (zero padding at l=0 / l=L-1)
        pos = lax.broadcasted_iota(jnp.int32, (1, L), 1)
        not_first = pos != 0
        not_last = pos != (L - 1)

        def silu(a):
            return a * jax.nn.sigmoid(a)

        def norm_stats(a, inv_n):
            # two-pass per-sample GroupNorm(groups=1) statistics (cancellation-safe)
            mean = jnp.sum(jnp.sum(a, axis=1, keepdims=True),
                           axis=0, keepdims=True) * inv_n          # (1, 1)
            d = a - mean
            var = jnp.sum(jnp.sum(d * d, axis=1, keepdims=True),
                          axis=0, keepdims=True) * inv_n           # (1, 1)
            return d, lax.rsqrt(var + eps)

        def conv3(act, taps, bias):
            # Conv1d(k=3, pad=1): three accumulating MXU dots over rolled taps.
            # Roll stays f32 (robust lowering); mask + cast fused in one select pass.
            a_c = act.astype(mxu_dtype)
            a_p = jnp.where(not_first, pltpu.roll(act, 1, 1), 0.0).astype(mxu_dtype)
            a_n = jnp.where(not_last, pltpu.roll(act, L - 1, 1), 0.0).astype(mxu_dtype)
            out = jnp.dot(taps[0], a_p, preferred_element_type=f32)
            out = out + jnp.dot(taps[1], a_c, preferred_element_type=f32)
            out = out + jnp.dot(taps[2], a_n, preferred_element_type=f32)
            return out + bias

        # ---- block1: GroupNorm -> SiLU -> Conv(k=3) ----
        d1, inv1 = norm_stats(x, inv_n1)
        xn = d1 * (inv1 * g1) + be1                  # folded affine: one FMA pass
        h = conv3(silu(xn), w1_taps, b1)             # (C_mid, L) f32

        # ---- mapping -> (scale, shift): SiLU -> Linear (per-sample matvec) ----
        sm = silu(m).astype(mxu_dtype)               # (F, 1)
        scale = jnp.dot(wss_ref[0], sm, preferred_element_type=f32) + ssb_scale
        shift = jnp.dot(wss_ref[1], sm, preferred_element_type=f32) + ssb_shift

        # ---- block2: GroupNorm + FiLM folded into ONE FMA pass ----
        d2, inv2 = norm_stats(h, inv_n2)
        a2 = (inv2 * g2) * (scale + 1.0)             # (C_mid, 1)
        c2 = be2 * (scale + 1.0) + shift             # (C_mid, 1)
        h2 = conv3(silu(d2 * a2 + c2), w2_taps, b2)

        # ---- to_out: 1x1 conv residual on the input ----
        res = jnp.dot(wo, x.astype(mxu_dtype), preferred_element_type=f32) + bo

        o_ref[...] = (h2 + res).astype(o_ref.dtype)

    return kernel


def patcher_forward(x, mapping, params, patch_size, *, mxu_dtype=jnp.bfloat16):
    """Patcher forward.  x: (B, C_in, L), mapping: (B, F).

    Mirrors Patcher(in_channels=C_in, out_channels=C_mid*patch_size, patch_size,
    context_mapping_features=F).  When C_in == C_mid the PyTorch module uses an
    Identity for `to_out`; pass wo=I, bo=0 in that case.
    """
    B, C_in, L = x.shape
    C_mid = params["w1"].shape[0]            # torch conv weight layout (C_mid, C_in, 3)
    F = mapping.shape[1]
    assert L % patch_size == 0
    f32 = jnp.float32

    # mapping as per-sample columns: (B, F, 1) -> kernel block sees (F, 1)
    m3 = mapping.astype(f32)[:, :, None]

    # ---- parameter packing (few DMA streams, constant index_map -> fetched once) ----
    gn1 = jnp.stack([params["gn1_g"], params["gn1_b"]], axis=1).astype(f32)      # (C_in, 2)
    cv = jnp.stack([params["b1"], params["gn2_g"], params["gn2_b"],
                    params["b2"], params["bo"],
                    params["ss_b"][:C_mid], params["ss_b"][C_mid:]],
                   axis=1).astype(f32)                                           # (C_mid, 7)
    # per-tap conv weights + 1x1 weight, pre-cast to the MXU dtype in the wrapper
    w1t = [params["w1"][:, :, t] for t in range(3)]
    w2t = [params["w2"][:, :, t] for t in range(3)]
    wpack = jnp.concatenate(w1t + w2t + [params["wo"]], axis=1).astype(mxu_dtype)
    wss = params["ss_w"].reshape(2, C_mid, F).astype(mxu_dtype)                  # (2, C_mid, F)

    kernel = _make_patcher_kernel(C_in, C_mid, F, L, mxu_dtype)
    Wcols = 3 * C_in + 3 * C_mid + C_in

    grid_spec = pl.GridSpec(
        grid=(B,),                                                  # one sample per step
        in_specs=[
            pl.BlockSpec((None, C_in, L), lambda b: (b, 0, 0)),     # x
            pl.BlockSpec((None, F, 1), lambda b: (b, 0, 0)),        # mapping column
            pl.BlockSpec((C_in, 2), lambda b: (0, 0)),              # gn1 gamma|beta
            pl.BlockSpec((C_mid, 7), lambda b: (0, 0)),             # per-channel columns
            pl.BlockSpec((C_mid, Wcols), lambda b: (0, 0)),         # packed conv/1x1 weights
            pl.BlockSpec((2, C_mid, F), lambda b: (0, 0, 0)),       # scale/shift Linear weight
        ],
        out_specs=pl.BlockSpec((None, C_mid, L), lambda b: (b, 0, 0)),
    )

    out = pl.pallas_call(
        kernel,
        out_shape=jax.ShapeDtypeStruct((B, C_mid, L), x.dtype),
        grid_spec=grid_spec,
        compiler_params=pltpu.CompilerParams(
            dimension_semantics=("parallel",),
            vmem_limit_bytes=_vmem_limit_bytes(),
        ),
    )(x, m3, gn1, cv, wpack, wss)

    # rearrange 'b c (l p) -> b (c p) l'  (single fused XLA reshape/transpose)
    Lp = L // patch_size
    out = out.reshape(B, C_mid, Lp, patch_size)
    out = jnp.transpose(out, (0, 1, 3, 2)).reshape(B, C_mid * patch_size, Lp)
    return out


def init_params(key, C_in, C_mid, F):
    ks = jax.random.split(key, 12)
    n = lambda k, shape, s=0.2: (s * jax.random.normal(k, shape)).astype(jnp.float32)
    return dict(
        gn1_g=(1.0 + n(ks[0], (C_in,))), gn1_b=n(ks[1], (C_in,)),
        w1=n(ks[2], (C_mid, C_in, 3)), b1=n(ks[3], (C_mid,)),
        ss_w=n(ks[4], (2 * C_mid, F)), ss_b=n(ks[5], (2 * C_mid,)),
        gn2_g=(1.0 + n(ks[6], (C_mid,))), gn2_b=n(ks[7], (C_mid,)),
        w2=n(ks[8], (C_mid, C_mid, 3)), b2=n(ks[9], (C_mid,)),
        wo=n(ks[10], (C_mid, C_in)), bo=n(ks[11], (C_mid,)),
    )


def ref_patcher(x, mapping, P, patch_size):
    """Pure-JAX reference mirroring the PyTorch forward (for verification)."""
    eps = 1e-5

    def gn(a, g, b):
        mu = jnp.mean(a, axis=(1, 2), keepdims=True)
        var = jnp.mean((a - mu) ** 2, axis=(1, 2), keepdims=True)
        return (a - mu) / jnp.sqrt(var + eps) * g[None, :, None] + b[None, :, None]

    silu = jax.nn.silu

    def conv(a, w, b, pad):
        y = lax.conv_general_dilated(a, w, window_strides=(1,), padding=[(pad, pad)],
                                     dimension_numbers=("NCH", "OIH", "NCH"))
        return y + b[None, :, None]

    h = conv(silu(gn(x, P["gn1_g"], P["gn1_b"])), P["w1"], P["b1"], 1)
    C = h.shape[1]
    ss = silu(mapping) @ P["ss_w"].T + P["ss_b"]
    scale, shift = ss[:, :C, None], ss[:, C:, None]
    h2 = gn(h, P["gn2_g"], P["gn2_b"]) * (scale + 1.0) + shift
    h2 = conv(silu(h2), P["w2"], P["b2"], 1)
    out = h2 + conv(x, P["wo"][:, :, None], P["bo"], 0)
    B, Cc, L = out.shape
    Lp = L // patch_size
    return jnp.transpose(out.reshape(B, Cc, Lp, patch_size),
                         (0, 1, 3, 2)).reshape(B, Cc * patch_size, Lp)


if __name__ == "__main__":
    # Small but lane-dense shapes (L multiple of 128 -> unmasked stores).
    B, C_in, L = 2, 4, 128
    out_channels, patch_size = 16, 2
    C_mid = out_channels // patch_size        # ResnetBlock1d output channels
    F = 8                                     # context_mapping_features

    key = jax.random.PRNGKey(0)
    kx, km, kp = jax.random.split(key, 3)
    x = jax.random.normal(kx, (B, C_in, L), dtype=jnp.float32)
    mapping = jax.random.normal(km, (B, F), dtype=jnp.float32)
    params = init_params(kp, C_in, C_mid, F)

    with jax.default_matmul_precision("highest"):
        ref = jax.block_until_ready(ref_patcher(x, mapping, params, patch_size))

    # f32-MXU path: tight parity with the pure-JAX / PyTorch math.
    out_f32 = jax.block_until_ready(
        patcher_forward(x, mapping, params, patch_size, mxu_dtype=jnp.float32))
    assert out_f32.shape == (B, out_channels, L // patch_size)
    np.testing.assert_allclose(np.asarray(out_f32), np.asarray(ref), rtol=1e-3, atol=1e-3)

    # Default bf16-MXU path (operands cast at the dots only, f32 accumulation).
    out_bf16 = jax.block_until_ready(patcher_forward(x, mapping, params, patch_size))
    np.testing.assert_allclose(np.asarray(out_bf16), np.asarray(ref), rtol=1e-1, atol=1e-1)

    print("KERNEL_OK")
</pallas_src>

<mosaic_0001>
module attributes {stable_mosaic.version = 11 : i64} {
  func.func @kernel(%arg0: i32, %arg1: memref<1x4x128xf32, #tpu.memory_space<vmem>>, %arg2: memref<1x8x1xf32, #tpu.memory_space<vmem>>, %arg3: memref<4x2xf32, #tpu.memory_space<vmem>>, %arg4: memref<8x7xf32, #tpu.memory_space<vmem>>, %arg5: memref<8x40xf32, #tpu.memory_space<vmem>>, %arg6: memref<2x8x8xf32, #tpu.memory_space<vmem>>, %arg7: memref<1x8x128xf32, #tpu.memory_space<vmem>>) attributes {dimension_semantics = [#tpu.dimension_semantics<parallel>], iteration_bounds = array<i64: 2>, scalar_prefetch = 0 : i64, scratch_operands = 0 : i64, tpu.core_type = #tpu.core_type<tc>, window_params = [{transform_indices = @transform_0, window_bounds = array<i64: 1, 4, 128>}, {transform_indices = @transform_1, window_bounds = array<i64: 1, 8, 1>}, {pipeline_mode = #tpu.pipeline_mode<synchronous>, transform_indices = @transform_2, window_bounds = array<i64: 4, 2>}, {pipeline_mode = #tpu.pipeline_mode<synchronous>, transform_indices = @transform_3, window_bounds = array<i64: 8, 7>}, {pipeline_mode = #tpu.pipeline_mode<synchronous>, transform_indices = @transform_4, window_bounds = array<i64: 8, 40>}, {pipeline_mode = #tpu.pipeline_mode<synchronous>, transform_indices = @transform_5, window_bounds = array<i64: 2, 8, 8>}, {transform_indices = @transform_6, window_bounds = array<i64: 1, 8, 128>}]} {
    %c0 = arith.constant 0 : index
    %c0_0 = arith.constant 0 : index
    %c0_1 = arith.constant 0 : index
    %0 = vector.load %arg1[%c0, %c0_0, %c0_1] : memref<1x4x128xf32, #tpu.memory_space<vmem>>, vector<1x4x128xf32>
    %1 = vector.shape_cast %0 : vector<1x4x128xf32> to vector<4x128xf32>
    %c0_2 = arith.constant 0 : index
    %c0_3 = arith.constant 0 : index
    %c0_4 = arith.constant 0 : index
    %2 = vector.load %arg2[%c0_2, %c0_3, %c0_4] : memref<1x8x1xf32, #tpu.memory_space<vmem>>, vector<1x8x1xf32>
    %3 = vector.shape_cast %2 : vector<1x8x1xf32> to vector<8x1xf32>
    %c0_5 = arith.constant 0 : index
    %c0_6 = arith.constant 0 : index
    %4 = vector.load %arg3[%c0_5, %c0_6] : memref<4x2xf32, #tpu.memory_space<vmem>>, vector<4x2xf32>
    %5 = vector.extract_strided_slice %4 {offsets = [0, 0], sizes = [4, 1], strides = [1, 1]} : vector<4x2xf32> to vector<4x1xf32>
    %6 = vector.extract_strided_slice %4 {offsets = [0, 1], sizes = [4, 1], strides = [1, 1]} : vector<4x2xf32> to vector<4x1xf32>
    %c0_7 = arith.constant 0 : index
    %c0_8 = arith.constant 0 : index
    %7 = vector.load %arg4[%c0_7, %c0_8] : memref<8x7xf32, #tpu.memory_space<vmem>>, vector<8x7xf32>
    %8 = vector.extract_strided_slice %7 {offsets = [0, 0], sizes = [8, 1], strides = [1, 1]} : vector<8x7xf32> to vector<8x1xf32>
    %9 = vector.extract_strided_slice %7 {offsets = [0, 1], sizes = [8, 1], strides = [1, 1]} : vector<8x7xf32> to vector<8x1xf32>
    %10 = vector.extract_strided_slice %7 {offsets = [0, 2], sizes = [8, 1], strides = [1, 1]} : vector<8x7xf32> to vector<8x1xf32>
    %11 = vector.extract_strided_slice %7 {offsets = [0, 3], sizes = [8, 1], strides = [1, 1]} : vector<8x7xf32> to vector<8x1xf32>
    %12 = vector.extract_strided_slice %7 {offsets = [0, 4], sizes = [8, 1], strides = [1, 1]} : vector<8x7xf32> to vector<8x1xf32>
    %13 = vector.extract_strided_slice %7 {offsets = [0, 5], sizes = [8, 1], strides = [1, 1]} : vector<8x7xf32> to vector<8x1xf32>
    %14 = vector.extract_strided_slice %7 {offsets = [0, 6], sizes = [8, 1], strides = [1, 1]} : vector<8x7xf32> to vector<8x1xf32>
    %c0_9 = arith.constant 0 : index
    %c0_10 = arith.constant 0 : index
    %15 = vector.load %arg5[%c0_9, %c0_10] : memref<8x40xf32, #tpu.memory_space<vmem>>, vector<8x40xf32>
    %16 = vector.extract_strided_slice %15 {offsets = [0, 0], sizes = [8, 4], strides = [1, 1]} : vector<8x40xf32> to vector<8x4xf32>
    %17 = vector.extract_strided_slice %15 {offsets = [0, 4], sizes = [8, 4], strides = [1, 1]} : vector<8x40xf32> to vector<8x4xf32>
    %18 = vector.extract_strided_slice %15 {offsets = [0, 8], sizes = [8, 4], strides = [1, 1]} : vector<8x40xf32> to vector<8x4xf32>
    %19 = vector.extract_strided_slice %15 {offsets = [0, 12], sizes = [8, 8], strides = [1, 1]} : vector<8x40xf32> to vector<8x8xf32>
    %20 = vector.extract_strided_slice %15 {offsets = [0, 20], sizes = [8, 8], strides = [1, 1]} : vector<8x40xf32> to vector<8x8xf32>
    %21 = vector.extract_strided_slice %15 {offsets = [0, 28], sizes = [8, 8], strides = [1, 1]} : vector<8x40xf32> to vector<8x8xf32>
    %22 = vector.extract_strided_slice %15 {offsets = [0, 36], sizes = [8, 4], strides = [1, 1]} : vector<8x40xf32> to vector<8x4xf32>
    %23 = tpu.iota {dimensions = array<i32: 1>} : vector<1x128xi32>
    %c0_i32 = arith.constant 0 : i32
    %24 = vector.broadcast %c0_i32 : i32 to vector<1x128xi32>
    %25 = arith.cmpi ne, %23, %24 : vector<1x128xi32>
    %c127_i32 = arith.constant 127 : i32
    %26 = vector.broadcast %c127_i32 : i32 to vector<1x128xi32>
    %27 = arith.cmpi ne, %23, %26 : vector<1x128xi32>
    %cst = arith.constant dense<0.000000e+00> : vector<4xf32>
    %28 = vector.multi_reduction <add>, %1, %cst [1] : vector<4x128xf32> to vector<4xf32>
    %29 = vector.shape_cast %28 : vector<4xf32> to vector<4x1xf32>
    %cst_11 = arith.constant dense<0.000000e+00> : vector<1xf32>
    %30 = vector.multi_reduction <add>, %29, %cst_11 [0] : vector<4x1xf32> to vector<1xf32>
    %31 = vector.shape_cast %30 : vector<1xf32> to vector<1x1xf32>
    %cst_12 = arith.constant 0.001953125 : f32
    %32 = vector.broadcast %cst_12 : f32 to vector<1x1xf32>
    %33 = arith.mulf %31, %32 : vector<1x1xf32>
    %34 = vector.broadcast %33 : vector<1x1xf32> to vector<4x128xf32>
    %35 = arith.subf %1, %34 : vector<4x128xf32>
    %36 = arith.mulf %35, %35 : vector<4x128xf32>
    %cst_13 = arith.constant dense<0.000000e+00> : vector<4xf32>
    %37 = vector.multi_reduction <add>, %36, %cst_13 [1] : vector<4x128xf32> to vector<4xf32>
    %38 = vector.shape_cast %37 : vector<4xf32> to vector<4x1xf32>
    %cst_14 = arith.constant dense<0.000000e+00> : vector<1xf32>
    %39 = vector.multi_reduction <add>, %38, %cst_14 [0] : vector<4x1xf32> to vector<1xf32>
    %40 = vector.shape_cast %39 : vector<1xf32> to vector<1x1xf32>
    %cst_15 = arith.constant 0.001953125 : f32
    %41 = vector.broadcast %cst_15 : f32 to vector<1x1xf32>
    %42 = arith.mulf %40, %41 : vector<1x1xf32>
    %cst_16 = arith.constant 9.99999974E-6 : f32
    %43 = vector.broadcast %cst_16 : f32 to vector<1x1xf32>
    %44 = arith.addf %42, %43 : vector<1x1xf32>
    %45 = math.rsqrt %44 : vector<1x1xf32>
    %46 = vector.broadcast %45 : vector<1x1xf32> to vector<4x1xf32>
    %47 = arith.mulf %46, %5 : vector<4x1xf32>
    %48 = vector.broadcast %47 : vector<4x1xf32> to vector<4x128xf32>
    %49 = arith.mulf %35, %48 : vector<4x128xf32>
    %50 = vector.broadcast %6 : vector<4x1xf32> to vector<4x128xf32>
    %51 = arith.addf %49, %50 : vector<4x128xf32>
    %52 = arith.negf %51 : vector<4x128xf32>
    %53 = math.exp %52 : vector<4x128xf32>
    %cst_17 = arith.constant 1.000000e+00 : f32
    %54 = vector.broadcast %cst_17 : f32 to vector<4x128xf32>
    %55 = arith.addf %54, %53 : vector<4x128xf32>
    %56 = arith.divf %54, %55 : vector<4x128xf32>
    %57 = arith.mulf %51, %56 : vector<4x128xf32>
    %c1_i32 = arith.constant 1 : i32
    %58 = tpu.dynamic_rotate %57 by %c1_i32 dim 1 : vector<4x128xf32>, i32 -> vector<4x128xf32>
    %cst_18 = arith.constant 0.000000e+00 : f32
    %59 = vector.shape_cast %25 : vector<1x128xi1> to vector<1x128xi1>
    %60 = vector.broadcast %59 : vector<1x128xi1> to vector<4x128xi1>
    %61 = vector.broadcast %cst_18 : f32 to vector<4x128xf32>
    %62 = arith.select %60, %58, %61 : vector<4x128xi1>, vector<4x128xf32>
    %c127_i32_19 = arith.constant 127 : i32
    %63 = tpu.dynamic_rotate %57 by %c127_i32_19 dim 1 : vector<4x128xf32>, i32 -> vector<4x128xf32>
    %cst_20 = arith.constant 0.000000e+00 : f32
    %64 = vector.shape_cast %27 : vector<1x128xi1> to vector<1x128xi1>
    %65 = vector.broadcast %64 : vector<1x128xi1> to vector<4x128xi1>
    %66 = vector.broadcast %cst_20 : f32 to vector<4x128xf32>
    %67 = arith.select %65, %63, %66 : vector<4x128xi1>, vector<4x128xf32>
    %cst_21 = arith.constant dense<0.000000e+00> : vector<8x128xf32>
    %68 = tpu.matmul %16, %62, %cst_21 {dimension_numbers = #tpu.dot_dimension_numbers<[1], [0], [0], [1], [0, 0, 1, 1], [], []>} : vector<8x4xf32>, vector<4x128xf32>, vector<8x128xf32> -> vector<8x128xf32>
    %cst_22 = arith.constant dense<0.000000e+00> : vector<8x128xf32>
    %69 = tpu.matmul %17, %57, %cst_22 {dimension_numbers = #tpu.dot_dimension_numbers<[1], [0], [0], [1], [0, 0, 1, 1], [], []>} : vector<8x4xf32>, vector<4x128xf32>, vector<8x128xf32> -> vector<8x128xf32>
    %70 = arith.addf %68, %69 : vector<8x128xf32>
    %cst_23 = arith.constant dense<0.000000e+00> : vector<8x128xf32>
    %71 = tpu.matmul %18, %67, %cst_23 {dimension_numbers = #tpu.dot_dimension_numbers<[1], [0], [0], [1], [0, 0, 1, 1], [], []>} : vector<8x4xf32>, vector<4x128xf32>, vector<8x128xf32> -> vector<8x128xf32>
    %72 = arith.addf %70, %71 : vector<8x128xf32>
    %73 = vector.broadcast %8 : vector<8x1xf32> to vector<8x128xf32>
    %74 = arith.addf %72, %73 : vector<8x128xf32>
    %75 = arith.negf %3 : vector<8x1xf32>
    %76 = math.exp %75 : vector<8x1xf32>
    %cst_24 = arith.constant 1.000000e+00 : f32
    %77 = vector.broadcast %cst_24 : f32 to vector<8x1xf32>
    %78 = arith.addf %77, %76 : vector<8x1xf32>
    %79 = arith.divf %77, %78 : vector<8x1xf32>
    %80 = arith.mulf %3, %79 : vector<8x1xf32>
    %c0_25 = arith.constant 0 : index
    %c0_26 = arith.constant 0 : index
    %c0_27 = arith.constant 0 : index
    %81 = vector.load %arg6[%c0_25, %c0_26, %c0_27] : memref<2x8x8xf32, #tpu.memory_space<vmem>>, vector<1x8x8xf32>
    %82 = vector.shape_cast %81 : vector<1x8x8xf32> to vector<8x8xf32>
    %cst_28 = arith.constant dense<0.000000e+00> : vector<8x1xf32>
    %83 = tpu.matmul %82, %80, %cst_28 {dimension_numbers = #tpu.dot_dimension_numbers<[1], [0], [0], [1], [0, 0, 1, 1], [], []>} : vector<8x8xf32>, vector<8x1xf32>, vector<8x1xf32> -> vector<8x1xf32>
    %84 = arith.addf %83, %13 : vector<8x1xf32>
    %c1 = arith.constant 1 : index
    %c0_29 = arith.constant 0 : index
    %c0_30 = arith.constant 0 : index
    %85 = vector.load %arg6[%c1, %c0_29, %c0_30] : memref<2x8x8xf32, #tpu.memory_space<vmem>>, vector<1x8x8xf32>
    %86 = vector.shape_cast %85 : vector<1x8x8xf32> to vector<8x8xf32>
    %cst_31 = arith.constant dense<0.000000e+00> : vector<8x1xf32>
    %87 = tpu.matmul %86, %80, %cst_31 {dimension_numbers = #tpu.dot_dimension_numbers<[1], [0], [0], [1], [0, 0, 1, 1], [], []>} : vector<8x8xf32>, vector<8x1xf32>, vector<8x1xf32> -> vector<8x1xf32>
    %88 = arith.addf %87, %14 : vector<8x1xf32>
    %cst_32 = arith.constant dense<0.000000e+00> : vector<8xf32>
    %89 = vector.multi_reduction <add>, %74, %cst_32 [1] : vector<8x128xf32> to vector<8xf32>
    %90 = vector.shape_cast %89 : vector<8xf32> to vector<8x1xf32>
    %cst_33 = arith.constant dense<0.000000e+00> : vector<1xf32>
    %91 = vector.multi_reduction <add>, %90, %cst_33 [0] : vector<8x1xf32> to vector<1xf32>
    %92 = vector.shape_cast %91 : vector<1xf32> to vector<1x1xf32>
    %cst_34 = arith.constant 9.765625E-4 : f32
    %93 = vector.broadcast %cst_34 : f32 to vector<1x1xf32>
    %94 = arith.mulf %92, %93 : vector<1x1xf32>
    %95 = vector.broadcast %94 : vector<1x1xf32> to vector<8x128xf32>
    %96 = arith.subf %74, %95 : vector<8x128xf32>
    %97 = arith.mulf %96, %96 : vector<8x128xf32>
    %cst_35 = arith.constant dense<0.000000e+00> : vector<8xf32>
    %98 = vector.multi_reduction <add>, %97, %cst_35 [1] : vector<8x128xf32> to vector<8xf32>
    %99 = vector.shape_cast %98 : vector<8xf32> to vector<8x1xf32>
    %cst_36 = arith.constant dense<0.000000e+00> : vector<1xf32>
    %100 = vector.multi_reduction <add>, %99, %cst_36 [0] : vector<8x1xf32> to vector<1xf32>
    %101 = vector.shape_cast %100 : vector<1xf32> to vector<1x1xf32>
    %cst_37 = arith.constant 9.765625E-4 : f32
    %102 = vector.broadcast %cst_37 : f32 to vector<1x1xf32>
    %103 = arith.mulf %101, %102 : vector<1x1xf32>
    %cst_38 = arith.constant 9.99999974E-6 : f32
    %104 = vector.broadcast %cst_38 : f32 to vector<1x1xf32>
    %105 = arith.addf %103, %104 : vector<1x1xf32>
    %106 = math.rsqrt %105 : vector<1x1xf32>
    %107 = vector.broadcast %106 : vector<1x1xf32> to vector<8x1xf32>
    %108 = arith.mulf %107, %9 : vector<8x1xf32>
    %cst_39 = arith.constant 1.000000e+00 : f32
    %109 = vector.broadcast %cst_39 : f32 to vector<8x1xf32>
    %110 = arith.addf %84, %109 : vector<8x1xf32>
    %111 = arith.mulf %108, %110 : vector<8x1xf32>
    %cst_40 = arith.constant 1.000000e+00 : f32
    %112 = vector.broadcast %cst_40 : f32 to vector<8x1xf32>
    %113 = arith.addf %84, %112 : vector<8x1xf32>
    %114 = arith.mulf %10, %113 : vector<8x1xf32>
    %115 = arith.addf %114, %88 : vector<8x1xf32>
    %116 = vector.broadcast %111 : vector<8x1xf32> to vector<8x128xf32>
    %117 = arith.mulf %96, %116 : vector<8x128xf32>
    %118 = vector.broadcast %115 : vector<8x1xf32> to vector<8x128xf32>
    %119 = arith.addf %117, %118 : vector<8x128xf32>
    %120 = arith.negf %119 : vector<8x128xf32>
    %121 = math.exp %120 : vector<8x128xf32>
    %cst_41 = arith.constant 1.000000e+00 : f32
    %122 = vector.broadcast %cst_41 : f32 to vector<8x128xf32>
    %123 = arith.addf %122, %121 : vector<8x128xf32>
    %124 = arith.divf %122, %123 : vector<8x128xf32>
    %125 = arith.mulf %119, %124 : vector<8x128xf32>
    %c1_i32_42 = arith.constant 1 : i32
    %126 = tpu.dynamic_rotate %125 by %c1_i32_42 dim 1 : vector<8x128xf32>, i32 -> vector<8x128xf32>
    %cst_43 = arith.constant 0.000000e+00 : f32
    %127 = vector.shape_cast %25 : vector<1x128xi1> to vector<1x128xi1>
    %128 = vector.broadcast %127 : vector<1x128xi1> to vector<8x128xi1>
    %129 = vector.broadcast %cst_43 : f32 to vector<8x128xf32>
    %130 = arith.select %128, %126, %129 : vector<8x128xi1>, vector<8x128xf32>
    %c127_i32_44 = arith.constant 127 : i32
    %131 = tpu.dynamic_rotate %125 by %c127_i32_44 dim 1 : vector<8x128xf32>, i32 -> vector<8x128xf32>
    %cst_45 = arith.constant 0.000000e+00 : f32
    %132 = vector.shape_cast %27 : vector<1x128xi1> to vector<1x128xi1>
    %133 = vector.broadcast %132 : vector<1x128xi1> to vector<8x128xi1>
    %134 = vector.broadcast %cst_45 : f32 to vector<8x128xf32>
    %135 = arith.select %133, %131, %134 : vector<8x128xi1>, vector<8x128xf32>
    %cst_46 = arith.constant dense<0.000000e+00> : vector<8x128xf32>
    %136 = tpu.matmul %19, %130, %cst_46 {dimension_numbers = #tpu.dot_dimension_numbers<[1], [0], [0], [1], [0, 0, 1, 1], [], []>} : vector<8x8xf32>, vector<8x128xf32>, vector<8x128xf32> -> vector<8x128xf32>
    %cst_47 = arith.constant dense<0.000000e+00> : vector<8x128xf32>
    %137 = tpu.matmul %20, %125, %cst_47 {dimension_numbers = #tpu.dot_dimension_numbers<[1], [0], [0], [1], [0, 0, 1, 1], [], []>} : vector<8x8xf32>, vector<8x128xf32>, vector<8x128xf32> -> vector<8x128xf32>
    %138 = arith.addf %136, %137 : vector<8x128xf32>
    %cst_48 = arith.constant dense<0.000000e+00> : vector<8x128xf32>
    %139 = tpu.matmul %21, %135, %cst_48 {dimension_numbers = #tpu.dot_dimension_numbers<[1], [0], [0], [1], [0, 0, 1, 1], [], []>} : vector<8x8xf32>, vector<8x128xf32>, vector<8x128xf32> -> vector<8x128xf32>
    %140 = arith.addf %138, %139 : vector<8x128xf32>
    %141 = vector.broadcast %11 : vector<8x1xf32> to vector<8x128xf32>
    %142 = arith.addf %140, %141 : vector<8x128xf32>
    %cst_49 = arith.constant dense<0.000000e+00> : vector<8x128xf32>
    %143 = tpu.matmul %22, %1, %cst_49 {dimension_numbers = #tpu.dot_dimension_numbers<[1], [0], [0], [1], [0, 0, 1, 1], [], []>} : vector<8x4xf32>, vector<4x128xf32>, vector<8x128xf32> -> vector<8x128xf32>
    %144 = vector.broadcast %12 : vector<8x1xf32> to vector<8x128xf32>
    %145 = arith.addf %143, %144 : vector<8x128xf32>
    %146 = arith.addf %142, %145 : vector<8x128xf32>
    %c0_50 = arith.constant 0 : index
    %c0_51 = arith.constant 0 : index
    %c0_52 = arith.constant 0 : index
    %147 = vector.load %arg7[%c0_50, %c0_51, %c0_52] : memref<1x8x128xf32, #tpu.memory_space<vmem>>, vector<1x8x128xf32>
    %148 = vector.shape_cast %147 : vector<1x8x128xf32> to vector<8x128xf32>
    %149 = vector.shape_cast %146 : vector<8x128xf32> to vector<1x8x128xf32>
    tpu.vector_store %arg7[%c0_50, %c0_51, %c0_52], %149 {strides = array<i32>} : memref<1x8x128xf32, #tpu.memory_space<vmem>>, vector<1x8x128xf32>,
    return
  }
  func.func @transform_0(%arg0: i32) -> (i32, i32, i32) {
    %c0_i32 = arith.constant 0 : i32
    %c0_i32_0 = arith.constant 0 : i32
    %c0_i32_1 = arith.constant 0 : i32
    return %arg0, %c0_i32, %c0_i32_0 : i32, i32, i32
  }
  func.func @transform_1(%arg0: i32) -> (i32, i32, i32) {
    %c0_i32 = arith.constant 0 : i32
    %c0_i32_0 = arith.constant 0 : i32
    %c0_i32_1 = arith.constant 0 : i32
    return %arg0, %c0_i32, %c0_i32_0 : i32, i32, i32
  }
  func.func @transform_2(%arg0: i32) -> (i32, i32) {
    %c0_i32 = arith.constant 0 : i32
    %c0_i32_0 = arith.constant 0 : i32
    %c0_i32_1 = arith.constant 0 : i32
    return %c0_i32, %c0_i32_0 : i32, i32
  }
  func.func @transform_3(%arg0: i32) -> (i32, i32) {
    %c0_i32 = arith.constant 0 : i32
    %c0_i32_0 = arith.constant 0 : i32
    %c0_i32_1 = arith.constant 0 : i32
    return %c0_i32, %c0_i32_0 : i32, i32
  }
  func.func @transform_4(%arg0: i32) -> (i32, i32) {
    %c0_i32 = arith.constant 0 : i32
    %c0_i32_0 = arith.constant 0 : i32
    %c0_i32_1 = arith.constant 0 : i32
    return %c0_i32, %c0_i32_0 : i32, i32
  }
  func.func @transform_5(%arg0: i32) -> (i32, i32, i32) {
    %c0_i32 = arith.constant 0 : i32
    %c0_i32_0 = arith.constant 0 : i32
    %c0_i32_1 = arith.constant 0 : i32
    %c0_i32_2 = arith.constant 0 : i32
    return %c0_i32, %c0_i32_0, %c0_i32_1 : i32, i32, i32
  }
  func.func @transform_6(%arg0: i32) -> (i32, i32, i32) {
    %c0_i32 = arith.constant 0 : i32
    %c0_i32_0 = arith.constant 0 : i32
    %c0_i32_1 = arith.constant 0 : i32
    return %arg0, %c0_i32, %c0_i32_0 : i32, i32, i32
  }
}

</mosaic_0001>

<llo_original>
// kernel: tpu_custom_call.1
$region0: #{tpu_custom_call.1}
  #allocation0 [shape = 'u32[]', space=smem, size = 0x4, offset = 0x4, fixed_abs, tag = 'smem constant byte address 0x4 - core index']
  #allocation1 [shape = 'u32[144,128]{1,0:T(1,128)}', space=vmem, size = 0x12000, scoped, tag = 'internal scratch']
  %s0 = inlined_call_operand.vmem [shape: f32[2,4,128], index: 0, kind: input, shape index: {}]
  %s1 = inlined_call_operand.vmem [shape: f32[2,8,1], index: 1, kind: input, shape index: {}]
  %s2 = inlined_call_operand.vmem [shape: f32[4,2], index: 2, kind: input, shape index: {}]
  %s3 = inlined_call_operand.hbm [shape: f32[8,7], index: 3, kind: input, shape index: {}]
  %s4 = inlined_call_operand.hbm [shape: f32[8,40], index: 4, kind: input, shape index: {}]
  %s5 = inlined_call_operand.vmem [shape: f32[2,8,8], index: 5, kind: input, shape index: {}]
  %s6 = inlined_call_operand.hbm [shape: f32[2,8,128], index: 6, kind: output, shape index: {}]
  %s7 = sld [smem:[#allocation0]]
  $region65: #{tpu_custom_call.1} parent=0
    _
  %s9 = ssub.s32 1, %s7
  %s10 = scalar_select 0, %s9, %s7
  $region1: #{tpu_custom_call.1} parent=0
    #allocation2 [shape = 'u8[4096]{0}', space=vmem, size = 0x1000, scoped, tag = 'input window, operand 3, single buffered']
    #allocation3 [shape = 's32[2]{0}', space=sflag, size = 0x8, scoped, tag = 'scoped memory for tpu_custom_call.1']
    #allocation4 [shape = 's32[2]{0}', space=sflag, size = 0x8, scoped, tag = 'scoped memory for tpu_custom_call.1']
    #allocation5 [shape = 'u8[4096]{0}', space=vmem, size = 0x1000, scoped, tag = 'input window, operand 4, single buffered']
    #allocation6 [shape = 's32[1]{0}', space=sflag, size = 0x4, scoped, tag = 'scoped memory for tpu_custom_call.1']
    #allocation7 [shape = 'u8[8192]{0}', space=vmem, size = 0x2000, scoped, tag = 'output window, operand 0']
    %11 = vsyncpa [#allocation3], 0
    %12 = vsyncpa [#allocation6], 0
    %13 = vsyncpa [#allocation4], 0
    %s14 = scalar_lea.sflag [#allocation4], 1
    %15 = vsyncpa %s14, 0
    loop: start=0, step=1, limit=4
    $region2: #{tpu_custom_call.1} parent=1 // loop_pre_header
      _
    $region3: #{tpu_custom_call.1} parent=1 // loop_header
      %s17 = sphi 0, %s21
      %p18 = scmp.ge.s32.totalorder %s17, 4
      %s27 = sphi 0, %s29
      %s30 = sphi 0, %s27
      %s31 = sphi 0, %s30
      %s47 = sphi 0, %s31
      %s53 = sphi 0, %s55
      %s56 = sphi 0, %s53
      %s57 = sphi 0, %s56
      %s73 = sphi 0, %s57
      %s77 = sphi 0, %s77
      %s79 = sphi 0, %s77
      %s80 = sphi 0, %s79
      %s94 = sphi 0, %s80
      %s98 = sphi 0, %s98
      %s100 = sphi 0, %s98
      %s101 = sphi 0, %s100
      %s115 = sphi 0, %s101
      %s119 = sphi 0, %s119
      %s121 = sphi 0, %s119
      %s122 = sphi 0, %s121
      %s136 = sphi 0, %s122
      %s140 = sphi 0, %s140
      %s142 = sphi 0, %s140
      %s143 = sphi 0, %s142
      %s157 = sphi 0, %s143
      %s163 = sphi 0, %s165
      %s166 = sphi 0, %s163
      %s167 = sphi 0, %s166
      %s183 = sphi 0, %s167
    $region4: #{tpu_custom_call.1} parent=1 // loop_header_branch
      %20 = sbr.rel (%p18) target = $region8
    $region5: #{tpu_custom_call.1} parent=1 // loop_body
      %s22 = ssub.s32 %s17, 1
      %s23 = ssub.s32 %s17, 2
      %s24 = sadd.s32 %s17, 1
      %s25 = ssub.s32 %s17, %s24
      %p26 = scmp.eq.s32.totalorder %s25, 0
      %s28 = sadd.s32 %s27, 1
      %s29 = scalar_select %p26, %s27, %s28
      %p32 = pneg %p26
      %p33 = scmp.eq.s32.totalorder %s17, 1
      %p34 = por %p32, %p33
      %p35 = scmp.ne.s32.totalorder %s27, %s30
      %p36 = scmp.eq.s32.totalorder %s17, 0
      %p37 = por %p35, %p36
      %p38 = scmp.ne.s32.totalorder %s27, %s30
      %p39 = scmp.eq.s32.totalorder %s22, 1
      %p40 = por %p38, %p39
      %p41 = scmp.ne.s32.totalorder %s30, %s31
      %p42 = scmp.eq.s32.totalorder %s22, 0
      %p43 = por %p41, %p42
      %p44 = scmp.ne.s32.totalorder %s30, %s31
      %p45 = scmp.eq.s32.totalorder %s23, 1
      %p46 = por %p44, %p45
      %p48 = scmp.ne.s32.totalorder %s31, %s47
      %p49 = scmp.eq.s32.totalorder %s23, 0
      %p50 = por %p48, %p49
      %s51 = ssub.s32 %s17, %s24
      %p52 = scmp.eq.s32.totalorder %s51, 0
      %s54 = sadd.s32 %s53, 1
      %s55 = scalar_select %p52, %s53, %s54
      %p58 = pneg %p52
      %p59 = scmp.eq.s32.totalorder %s17, 1
      %p60 = por %p58, %p59
      %p61 = scmp.ne.s32.totalorder %s53, %s56
      %p62 = scmp.eq.s32.totalorder %s17, 0
      %p63 = por %p61, %p62
      %p64 = scmp.ne.s32.totalorder %s53, %s56
      %p65 = scmp.eq.s32.totalorder %s22, 1
      %p66 = por %p64, %p65
      %p67 = scmp.ne.s32.totalorder %s56, %s57
      %p68 = scmp.eq.s32.totalorder %s22, 0
      %p69 = por %p67, %p68
      %p70 = scmp.ne.s32.totalorder %s56, %s57
      %p71 = scmp.eq.s32.totalorder %s23, 1
      %p72 = por %p70, %p71
      %p74 = scmp.ne.s32.totalorder %s57, %s73
      %p75 = scmp.eq.s32.totalorder %s23, 0
      %p76 = por %p74, %p75
      %s78 = sadd.s32 %s77, 1
      %p81 = scmp.eq.s32.totalorder %s17, 1
      %p82 = scmp.ne.s32.totalorder %s77, %s79
      %p83 = scmp.eq.s32.totalorder %s17, 0
      %p84 = por %p82, %p83
      %p85 = scmp.ne.s32.totalorder %s77, %s79
      %p86 = scmp.eq.s32.totalorder %s22, 1
      %p87 = por %p85, %p86
      %p88 = scmp.ne.s32.totalorder %s79, %s80
      %p89 = scmp.eq.s32.totalorder %s22, 0
      %p90 = por %p88, %p89
      %p91 = scmp.ne.s32.totalorder %s79, %s80
      %p92 = scmp.eq.s32.totalorder %s23, 1
      %p93 = por %p91, %p92
      %p95 = scmp.ne.s32.totalorder %s80, %s94
      %p96 = scmp.eq.s32.totalorder %s23, 0
      %p97 = por %p95, %p96
      %s99 = sadd.s32 %s98, 1
      %p102 = scmp.eq.s32.totalorder %s17, 1
      %p103 = scmp.ne.s32.totalorder %s98, %s100
      %p104 = scmp.eq.s32.totalorder %s17, 0
      %p105 = por %p103, %p104
      %p106 = scmp.ne.s32.totalorder %s98, %s100
      %p107 = scmp.eq.s32.totalorder %s22, 1
      %p108 = por %p106, %p107
      %p109 = scmp.ne.s32.totalorder %s100, %s101
      %p110 = scmp.eq.s32.totalorder %s22, 0
      %p111 = por %p109, %p110
      %p112 = scmp.ne.s32.totalorder %s100, %s101
      %p113 = scmp.eq.s32.totalorder %s23, 1
      %p114 = por %p112, %p113
      %p116 = scmp.ne.s32.totalorder %s101, %s115
      %p117 = scmp.eq.s32.totalorder %s23, 0
      %p118 = por %p116, %p117
      %s120 = sadd.s32 %s119, 1
      %p123 = scmp.eq.s32.totalorder %s17, 1
      %p124 = scmp.ne.s32.totalorder %s119, %s121
      %p125 = scmp.eq.s32.totalorder %s17, 0
      %p126 = por %p124, %p125
      %p127 = scmp.ne.s32.totalorder %s119, %s121
      %p128 = scmp.eq.s32.totalorder %s22, 1
      %p129 = por %p127, %p128
      %p130 = scmp.ne.s32.totalorder %s121, %s122
      %p131 = scmp.eq.s32.totalorder %s22, 0
      %p132 = por %p130, %p131
      %p133 = scmp.ne.s32.totalorder %s121, %s122
      %p134 = scmp.eq.s32.totalorder %s23, 1
      %p135 = por %p133, %p134
      %p137 = scmp.ne.s32.totalorder %s122, %s136
      %p138 = scmp.eq.s32.totalorder %s23, 0
      %p139 = por %p137, %p138
      %s141 = sadd.s32 %s140, 1
      %p144 = scmp.eq.s32.totalorder %s17, 1
      %p145 = scmp.ne.s32.totalorder %s140, %s142
      %p146 = scmp.eq.s32.totalorder %s17, 0
      %p147 = por %p145, %p146
      %p148 = scmp.ne.s32.totalorder %s140, %s142
      %p149 = scmp.eq.s32.totalorder %s22, 1
      %p150 = por %p148, %p149
      %p151 = scmp.ne.s32.totalorder %s142, %s143
      %p152 = scmp.eq.s32.totalorder %s22, 0
      %p153 = por %p151, %p152
      %p154 = scmp.ne.s32.totalorder %s142, %s143
      %p155 = scmp.eq.s32.totalorder %s23, 1
      %p156 = por %p154, %p155
      %p158 = scmp.ne.s32.totalorder %s143, %s157
      %p159 = scmp.eq.s32.totalorder %s23, 0
      %p160 = por %p158, %p159
      %s161 = ssub.s32 %s17, %s24
      %p162 = scmp.eq.s32.totalorder %s161, 0
      %s164 = sadd.s32 %s163, 1
      %s165 = scalar_select %p162, %s163, %s164
      %p168 = pneg %p162
      %p169 = scmp.eq.s32.totalorder %s17, 1
      %p170 = por %p168, %p169
      %p171 = scmp.ne.s32.totalorder %s163, %s166
      %p172 = scmp.eq.s32.totalorder %s17, 0
      %p173 = por %p171, %p172
      %p174 = scmp.ne.s32.totalorder %s163, %s166
      %p175 = scmp.eq.s32.totalorder %s22, 1
      %p176 = por %p174, %p175
      %p177 = scmp.ne.s32.totalorder %s166, %s167
      %p178 = scmp.eq.s32.totalorder %s22, 0
      %p179 = por %p177, %p178
      %p180 = scmp.ne.s32.totalorder %s166, %s167
      %p181 = scmp.eq.s32.totalorder %s23, 1
      %p182 = por %p180, %p181
      %p184 = scmp.ne.s32.totalorder %s167, %s183
      %p185 = scmp.eq.s32.totalorder %s23, 0
      %p186 = por %p184, %p185
      %p187 = scmp.le.s32.totalorder 1, %s17
      %p188 = scmp.lt.s32.totalorder %s17, 3
      %p189 = pnand %p187, %p188
      %p190 = pneg %p189
      // Predicated region
      $region9: #{tpu_custom_call.1} parent=5 // pred_check
        _
      $region10: #{tpu_custom_call.1} parent=5 // pred_check_branch
        %192 = sbr.rel (%p189) target = $region12
      $region11: #{tpu_custom_call.1} parent=5 // pred_region
        %s193 = ssub.s32 %s17, 1
        // Predicated region
        $region13: #{tpu_custom_call.1} parent=11 // pred_check
          %p194 = pneg %p90
        $region14: #{tpu_custom_call.1} parent=11 // pred_check_branch
          %196 = sbr.rel (%p194) target = $region16
        $region15: #{tpu_custom_call.1} parent=11 // pred_region
          _
        $region16: #{tpu_custom_call.1} parent=11 // pred_fallthru
          _
        // Predicated region
        $region17: #{tpu_custom_call.1} parent=11 // pred_check
          %p197 = pneg %p111
        $region18: #{tpu_custom_call.1} parent=11 // pred_check_branch
          %199 = sbr.rel (%p197) target = $region20
        $region19: #{tpu_custom_call.1} parent=11 // pred_region
          %s201 = ssub.s32 128, 128
          %202 = vsyncadd [#allocation3], %s201
          %s204 = sshll.u32 [#allocation2], 4
          %s205 = int_to_ptr.vmem [resolvable:$true] %s204
          %207 = dma.hbm_to_vmem [thread:$0]  %s3, 128, %s205, [#allocation3]
        $region20: #{tpu_custom_call.1} parent=11 // pred_fallthru
          _
        // Predicated region
        $region21: #{tpu_custom_call.1} parent=11 // pred_check
          %p208 = pneg %p132
        $region22: #{tpu_custom_call.1} parent=11 // pred_check_branch
          %210 = sbr.rel (%p208) target = $region24
        $region23: #{tpu_custom_call.1} parent=11 // pred_region
          %s212 = ssub.s32 128, 128
          %213 = vsyncadd [#allocation6], %s212
          %s215 = sshll.u32 [#allocation5], 4
          %s216 = int_to_ptr.vmem [resolvable:$true] %s215
          %218 = dma.hbm_to_vmem [thread:$0]  %s4, 128, %s216, [#allocation6]
        $region24: #{tpu_custom_call.1} parent=11 // pred_fallthru
          _
        // Predicated region
        $region25: #{tpu_custom_call.1} parent=11 // pred_check
          %p219 = pneg %p153
        $region26: #{tpu_custom_call.1} parent=11 // pred_check_branch
          %221 = sbr.rel (%p219) target = $region28
        $region27: #{tpu_custom_call.1} parent=11 // pred_region
          _
        $region28: #{tpu_custom_call.1} parent=11 // pred_fallthru
          _
      $region12: #{tpu_custom_call.1} parent=5 // pred_fallthru
        _
      %p222 = scmp.lt.s32.totalorder %s17, 2
      // Predicated region
      $region29: #{tpu_custom_call.1} parent=5 // pred_check
        %p223 = pneg %p222
      $region30: #{tpu_custom_call.1} parent=5 // pred_check_branch
        %225 = sbr.rel (%p223) target = $region32
      $region31: #{tpu_custom_call.1} parent=5 // pred_region
        // Predicated region
        $region33: #{tpu_custom_call.1} parent=31 // pred_check
          %p226 = pneg %p37
        $region34: #{tpu_custom_call.1} parent=31 // pred_check_branch
          %228 = sbr.rel (%p226) target = $region36
        $region35: #{tpu_custom_call.1} parent=31 // pred_region
          %p229 = scmp.lt.s32.totalorder %s17, 1
          %s230 = scalar_select %p229, %s17, 1
          %s231 = smul.addr %s230, 4
          %s232 = scalar_lea.vmem %s0, %s231
        $region36: #{tpu_custom_call.1} parent=31 // pred_fallthru
          _
        // Predicated region
        $region37: #{tpu_custom_call.1} parent=31 // pred_check
          %p233 = pneg %p63
        $region38: #{tpu_custom_call.1} parent=31 // pred_check_branch
          %235 = sbr.rel (%p233) target = $region40
        $region39: #{tpu_custom_call.1} parent=31 // pred_region
          %p236 = scmp.lt.s32.totalorder %s17, 1
          %s237 = scalar_select %p236, %s17, 1
          %s238 = smul.addr %s237, 8
          %s239 = scalar_lea.vmem %s1, %s238
        $region40: #{tpu_custom_call.1} parent=31 // pred_fallthru
          _
      $region32: #{tpu_custom_call.1} parent=5 // pred_fallthru
        _
      %p240 = scmp.le.s32.totalorder 1, %s17
      %p241 = scmp.lt.s32.totalorder %s17, 3
      %p242 = pnand %p240, %p241
      %p243 = pneg %p242
      // Predicated region
      $region41: #{tpu_custom_call.1} parent=5 // pred_check
        _
      $region42: #{tpu_custom_call.1} parent=5 // pred_check_branch
        %245 = sbr.rel (%p242) target = $region44
      $region43: #{tpu_custom_call.1} parent=5 // pred_region
        %s246 = ssub.s32 %s17, 1
        // Predicated region
        $region45: #{tpu_custom_call.1} parent=43 // pred_check
          %p247 = pneg %p111
        $region46: #{tpu_custom_call.1} parent=43 // pred_check_branch
          %249 = sbr.rel (%p247) target = $region48
        $region47: #{tpu_custom_call.1} parent=43 // pred_region
          %250 = dma.done [#allocation3], 128
        $region48: #{tpu_custom_call.1} parent=43 // pred_fallthru
          _
        // Predicated region
        $region49: #{tpu_custom_call.1} parent=43 // pred_check
          %p251 = pneg %p132
        $region50: #{tpu_custom_call.1} parent=43 // pred_check_branch
          %253 = sbr.rel (%p251) target = $region52
        $region51: #{tpu_custom_call.1} parent=43 // pred_region
          %254 = dma.done [#allocation6], 128
        $region52: #{tpu_custom_call.1} parent=43 // pred_fallthru
          _
        %p255 = scmp.lt.s32.totalorder %s22, 1
        %s256 = scalar_select %p255, %s22, 1
        %s257 = smul.addr %s256, 4
        %s258 = scalar_lea.vmem %s0, %s257
        %p259 = pneg %p43
        %p260 = pneg %p40
        %p261 = scmp.lt.s32.totalorder %s22, 1
        %s262 = scalar_select %p261, %s22, 1
        %s263 = smul.addr %s262, 8
        %s264 = scalar_lea.vmem %s1, %s263
        %p265 = pneg %p69
        %p266 = pneg %p66
        %p267 = pneg %p90
        %p268 = pneg %p87
        %p269 = pneg %p111
        %p270 = pneg %p108
        %p271 = pneg %p132
        %p272 = pneg %p129
        %p273 = pneg %p153
        %p274 = pneg %p150
        %p275 = pneg %p179
        %p276 = pneg %p176
        %s277 = sand.u32 %s166, 1
        %s278 = scalar_lea.sflag [#allocation4], %s277
        %s279 = sand.u32 %s166, 1
        %s280 = smul.addr %s279, 8
        %s281 = scalar_lea.vmem [#allocation7], %s280
        %p282 = scmp.lt.s32.totalorder %s22, 1
        %s283 = scalar_select %p282, %s22, 1
        %s284 = smul.addr %s283, 4
        %s285 = scalar_lea.vmem %s0, %s284
        %p286 = scmp.lt.s32.totalorder %s22, 1
        %s287 = scalar_select %p286, %s22, 1
        %s288 = smul.addr %s287, 8
        %s289 = scalar_lea.vmem %s1, %s288
        %v290 = vld [vmem:[%s285] sm:$0xf]
        %v291 = vld [vmem:[%s289] sm:$0xff]
        %v292 = vld [vmem:[%s2] sm:$0xf]
        %v293 = vld [vmem:[#allocation2] sm:$0xff]
        %v294 = vld [vmem:[#allocation5] sm:$0xff]
        %v295 = vlaneseq
        %v296 = vand.u32 %v295, 127
        %vm297 = vcmp.ne.s32.totalorder %v296, 0
        %vm298 = vcmp.ne.s32.totalorder %v296, 127
        %vm299 = vcmask 1043456
        %v300 = vsel %vm299, %v290, 0.0
        %301 = vadd.xlane.f32.xlu0 %v300
        %v302 = vpop.xlane.xlu0 %301
        %v303 = vsel %vm299, %v302, 0.0
        %v304 = vrot.slane %v303, 4
        %v305 = vadd.f32 %v303, %v304
        %v306 = vrot.slane %v305, 2
        %v307 = vadd.f32 %v305, %v306
        %v308 = vrot.slane %v307, 1
        %v309 = vadd.f32 %v307, %v308
        %v310 = vmul.f32 %v309, 0.001953125
        %v311 = vsub.f32 %v290, %v310
        %v312 = vmul.f32 %v311, %v311
        %v313 = vsel %vm299, %v312, 0.0
        %314 = vadd.xlane.f32.xlu0 %v313
        %v315 = vpop.xlane.xlu0 %314
        %v316 = vsel %vm299, %v315, 0.0
        %v317 = vrot.slane %v316, 4
        %v318 = vadd.f32 %v316, %v317
        %v319 = vrot.slane %v318, 2
        %v320 = vadd.f32 %v318, %v319
        %v321 = vrot.slane %v320, 1
        %v322 = vadd.f32 %v320, %v321
        %v323 = vmul.f32 %v322, 0.001953125
        %v324 = vadd.f32 %v323, 1e-05
        %v325 = vrsqrt.pop %v324
        %v326 = vmul.f32 %v325, %v292
        %328 = vset.pattern.permute.xlu0 0
        %329 = vperm.xlu0 %328, %v326
        %v330 = vpop.permute.xlu0 %329
        %v332 = vmul.f32 %v311, %v330
        %334 = vset.pattern.permute.xlu0 1
        %335 = vperm.xlu0 %334, %v292
        %v336 = vpop.permute.xlu0 %335
        %v338 = vadd.f32 %v332, %v336
        %v339 = vxor.u32 %v338, 2147483648
        %v340 = vmul.f32 %v339, 1.442695
        %v341 = vpow.pop %v340
        %v342 = vadd.f32 %v341, 1.0
        %v343 = vrcp.pop %v342
        %v344 = vmul.f32 1.0, %v343
        %v345 = vmul.f32 %v338, %v344
        %346 = vrot.lane.b32.xlu0 %v345, 1
        %v347 = vpop.permute.xlu0 %346
        %v348 = vsel %vm297, 1, 0
        %vm349 = vcmp.eq.s32.totalorder %v348, 1
        %v350 = vsel %vm349, %v347, 0.0
        %351 = vrot.lane.b32.xlu0 %v345, 127
        %v352 = vpop.permute.xlu0 %351
        %v353 = vsel %vm298, 1, 0
        %vm354 = vcmp.eq.s32.totalorder %v353, 1
        %v355 = vsel %vm354, %v352, 0.0
        %357 = vrot.lane.b32.xlu0 %v294, 124
        %v358 = vpop.permute.xlu0 %357
        %vm359 = vcmask 31744
        %v360 = vsel %vm359, %v358, 0
        %v363 = vsel %vm299, %v345, 0
        %365 = vmatprep.subr.mxu0 0.0
        %366 = vmatpush1.msra.mxu0 0.0
        %367 = vmatprep.subr.mxu0 0.0
        %368 = vmatpush1.msra.mxu0 0.0
        %369 = vmatprep.subr.mxu0 0.0
        %370 = vmatpush1.msra.mxu0 0.0
        %371 = vmatprep.subr.mxu0 0.0
        %372 = vmatpush1.msra.mxu0 0.0
        %373 = vmatprep.subr.mxu0 0.0
        %374 = vmatpush1.msra.mxu0 0.0
        %375 = vmatprep.subr.mxu0 0.0
        %376 = vmatpush1.msra.mxu0 0.0
        %377 = vmatprep.subr.mxu0 0.0
        %378 = vmatpush1.msra.mxu0 0.0
        %379 = vmatprep.subr.mxu0 0.0
        %380 = vmatpush1.msra.mxu0 0.0
        %381 = vmatprep.subr.mxu0 0.0
        %382 = vmatpush1.msra.mxu0 0.0
        %383 = vmatprep.subr.mxu0 0.0
        %384 = vmatpush1.msra.mxu0 0.0
        %385 = vmatprep.subr.mxu0 0.0
        %386 = vmatpush1.msra.mxu0 0.0
        %387 = vmatprep.subr.mxu0 0.0
        %388 = vmatpush1.msra.mxu0 0.0
        %389 = vmatprep.subr.mxu0 0.0
        %390 = vmatpush1.msra.mxu0 0.0
        %391 = vmatprep.subr.mxu0 0.0
        %392 = vmatpush1.msra.mxu0 0.0
        %393 = vmatprep.subr.mxu0 0.0
        %394 = vmatpush1.msra.mxu0 0.0
        %395 = vmatprep.subr.mxu0 0.0
        %396 = vmatpush1.msra.mxu0 %v363
        %397 = vmatprep.subr.mxu0 0.0
        %398 = vmatpush2.msra.mxu0 0.0
        %399 = vmatprep.subr.mxu0 0.0
        %400 = vmatpush2.msra.mxu0 0.0
        %401 = vmatprep.subr.mxu0 0.0
        %402 = vmatpush2.msra.mxu0 0.0
        %403 = vmatprep.subr.mxu0 0.0
        %404 = vmatpush2.msra.mxu0 0.0
        %405 = vmatprep.subr.mxu0 0.0
        %406 = vmatpush2.msra.mxu0 0.0
        %407 = vmatprep.subr.mxu0 0.0
        %408 = vmatpush2.msra.mxu0 0.0
        %409 = vmatprep.subr.mxu0 0.0
        %410 = vmatpush2.msra.mxu0 0.0
        %411 = vmatprep.subr.mxu0 0.0
        %412 = vmatpush2.msra.mxu0 0.0
        %413 = vmatprep.subr.mxu0 0.0
        %414 = vmatpush2.msra.mxu0 0.0
        %415 = vmatprep.subr.mxu0 0.0
        %416 = vmatpush2.msra.mxu0 0.0
        %417 = vmatprep.subr.mxu0 0.0
        %418 = vmatpush2.msra.mxu0 0.0
        %419 = vmatprep.subr.mxu0 0.0
        %420 = vmatpush2.msra.mxu0 0.0
        %421 = vmatprep.subr.mxu0 0.0
        %422 = vmatpush2.msra.mxu0 0.0
        %423 = vmatprep.subr.mxu0 0.0
        %424 = vmatpush2.msra.mxu0 0.0
        %425 = vmatprep.subr.mxu0 0.0
        %426 = vmatpush2.msra.mxu0 0.0
        %427 = vmatprep.subr.mxu0 0.0
        %428 = vmatpush2.msra.mxu0 0.0
        %429 = vmatprep.mubr.f32.mxu0 0.0
        %430 = vmatmul.mubr.f32.gmra.mxu0 %v360
        %v431 = vpop.f32.mrf.mxu0
        %v432 = vadd.f32 0.0, %v431
        %v433 = vpop.f32.mrf.mxu0
        %434 = vdwg.mxu0
        %v435 = vsel %vm359, %v294, 0
        %v438 = vsel %vm299, %v350, 0
        %440 = vmatprep.subr.mxu0 0.0
        %441 = vmatpush1.msra.mxu0 0.0
        %442 = vmatprep.subr.mxu0 0.0
        %443 = vmatpush1.msra.mxu0 0.0
        %444 = vmatprep.subr.mxu0 0.0
        %445 = vmatpush1.msra.mxu0 0.0
        %446 = vmatprep.subr.mxu0 0.0
        %447 = vmatpush1.msra.mxu0 0.0
        %448 = vmatprep.subr.mxu0 0.0
        %449 = vmatpush1.msra.mxu0 0.0
        %450 = vmatprep.subr.mxu0 0.0
        %451 = vmatpush1.msra.mxu0 0.0
        %452 = vmatprep.subr.mxu0 0.0
        %453 = vmatpush1.msra.mxu0 0.0
        %454 = vmatprep.subr.mxu0 0.0
        %455 = vmatpush1.msra.mxu0 0.0
        %456 = vmatprep.subr.mxu0 0.0
        %457 = vmatpush1.msra.mxu0 0.0
        %458 = vmatprep.subr.mxu0 0.0
        %459 = vmatpush1.msra.mxu0 0.0
        %460 = vmatprep.subr.mxu0 0.0
        %461 = vmatpush1.msra.mxu0 0.0
        %462 = vmatprep.subr.mxu0 0.0
        %463 = vmatpush1.msra.mxu0 0.0
        %464 = vmatprep.subr.mxu0 0.0
        %465 = vmatpush1.msra.mxu0 0.0
        %466 = vmatprep.subr.mxu0 0.0
        %467 = vmatpush1.msra.mxu0 0.0
        %468 = vmatprep.subr.mxu0 0.0
        %469 = vmatpush1.msra.mxu0 0.0
        %470 = vmatprep.subr.mxu0 0.0
        %471 = vmatpush1.msra.mxu0 %v438
        %472 = vmatprep.subr.mxu0 0.0
        %473 = vmatpush2.msra.mxu0 0.0
        %474 = vmatprep.subr.mxu0 0.0
        %475 = vmatpush2.msra.mxu0 0.0
        %476 = vmatprep.subr.mxu0 0.0
        %477 = vmatpush2.msra.mxu0 0.0
        %478 = vmatprep.subr.mxu0 0.0
        %479 = vmatpush2.msra.mxu0 0.0
        %480 = vmatprep.subr.mxu0 0.0
        %481 = vmatpush2.msra.mxu0 0.0
        %482 = vmatprep.subr.mxu0 0.0
        %483 = vmatpush2.msra.mxu0 0.0
        %484 = vmatprep.subr.mxu0 0.0
        %485 = vmatpush2.msra.mxu0 0.0
        %486 = vmatprep.subr.mxu0 0.0
        %487 = vmatpush2.msra.mxu0 0.0
        %488 = vmatprep.subr.mxu0 0.0
        %489 = vmatpush2.msra.mxu0 0.0
        %490 = vmatprep.subr.mxu0 0.0
        %491 = vmatpush2.msra.mxu0 0.0
        %492 = vmatprep.subr.mxu0 0.0
        %493 = vmatpush2.msra.mxu0 0.0
        %494 = vmatprep.subr.mxu0 0.0
        %495 = vmatpush2.msra.mxu0 0.0
        %496 = vmatprep.subr.mxu0 0.0
        %497 = vmatpush2.msra.mxu0 0.0
        %498 = vmatprep.subr.mxu0 0.0
        %499 = vmatpush2.msra.mxu0 0.0
        %500 = vmatprep.subr.mxu0 0.0
        %501 = vmatpush2.msra.mxu0 0.0
        %502 = vmatprep.subr.mxu0 0.0
        %503 = vmatpush2.msra.mxu0 0.0
        %504 = vmatprep.mubr.f32.mxu0 0.0
        %505 = vmatmul.mubr.f32.gmra.mxu0 %v435
        %v506 = vpop.f32.mrf.mxu0
        %v507 = vadd.f32 %v432, %v506
        %v508 = vpop.f32.mrf.mxu0
        %509 = vdwg.mxu0
        %510 = vrot.lane.b32.xlu0 %v294, 120
        %v511 = vpop.permute.xlu0 %510
        %v512 = vsel %vm359, %v511, 0
        %v515 = vsel %vm299, %v355, 0
        %517 = vmatprep.subr.mxu0 0.0
        %518 = vmatpush1.msra.mxu0 0.0
        %519 = vmatprep.subr.mxu0 0.0
        %520 = vmatpush1.msra.mxu0 0.0
        %521 = vmatprep.subr.mxu0 0.0
        %522 = vmatpush1.msra.mxu0 0.0
        %523 = vmatprep.subr.mxu0 0.0
        %524 = vmatpush1.msra.mxu0 0.0
        %525 = vmatprep.subr.mxu0 0.0
        %526 = vmatpush1.msra.mxu0 0.0
        %527 = vmatprep.subr.mxu0 0.0
        %528 = vmatpush1.msra.mxu0 0.0
        %529 = vmatprep.subr.mxu0 0.0
        %530 = vmatpush1.msra.mxu0 0.0
        %531 = vmatprep.subr.mxu0 0.0
        %532 = vmatpush1.msra.mxu0 0.0
        %533 = vmatprep.subr.mxu0 0.0
        %534 = vmatpush1.msra.mxu0 0.0
        %535 = vmatprep.subr.mxu0 0.0
        %536 = vmatpush1.msra.mxu0 0.0
        %537 = vmatprep.subr.mxu0 0.0
        %538 = vmatpush1.msra.mxu0 0.0
        %539 = vmatprep.subr.mxu0 0.0
        %540 = vmatpush1.msra.mxu0 0.0
        %541 = vmatprep.subr.mxu0 0.0
        %542 = vmatpush1.msra.mxu0 0.0
        %543 = vmatprep.subr.mxu0 0.0
        %544 = vmatpush1.msra.mxu0 0.0
        %545 = vmatprep.subr.mxu0 0.0
        %546 = vmatpush1.msra.mxu0 0.0
        %547 = vmatprep.subr.mxu0 0.0
        %548 = vmatpush1.msra.mxu0 %v515
        %549 = vmatprep.subr.mxu0 0.0
        %550 = vmatpush2.msra.mxu0 0.0
        %551 = vmatprep.subr.mxu0 0.0
        %552 = vmatpush2.msra.mxu0 0.0
        %553 = vmatprep.subr.mxu0 0.0
        %554 = vmatpush2.msra.mxu0 0.0
        %555 = vmatprep.subr.mxu0 0.0
        %556 = vmatpush2.msra.mxu0 0.0
        %557 = vmatprep.subr.mxu0 0.0
        %558 = vmatpush2.msra.mxu0 0.0
        %559 = vmatprep.subr.mxu0 0.0
        %560 = vmatpush2.msra.mxu0 0.0
        %561 = vmatprep.subr.mxu0 0.0
        %562 = vmatpush2.msra.mxu0 0.0
        %563 = vmatprep.subr.mxu0 0.0
        %564 = vmatpush2.msra.mxu0 0.0
        %565 = vmatprep.subr.mxu0 0.0
        %566 = vmatpush2.msra.mxu0 0.0
        %567 = vmatprep.subr.mxu0 0.0
        %568 = vmatpush2.msra.mxu0 0.0
        %569 = vmatprep.subr.mxu0 0.0
        %570 = vmatpush2.msra.mxu0 0.0
        %571 = vmatprep.subr.mxu0 0.0
        %572 = vmatpush2.msra.mxu0 0.0
        %573 = vmatprep.subr.mxu0 0.0
        %574 = vmatpush2.msra.mxu0 0.0
        %575 = vmatprep.subr.mxu0 0.0
        %576 = vmatpush2.msra.mxu0 0.0
        %577 = vmatprep.subr.mxu0 0.0
        %578 = vmatpush2.msra.mxu0 0.0
        %579 = vmatprep.subr.mxu0 0.0
        %580 = vmatpush2.msra.mxu0 0.0
        %581 = vmatprep.mubr.f32.mxu0 0.0
        %582 = vmatmul.mubr.f32.gmra.mxu0 %v512
        %v583 = vpop.f32.mrf.mxu0
        %v584 = vadd.f32 0.0, %v583
        %v585 = vpop.f32.mrf.mxu0
        %586 = vdwg.mxu0
        %v587 = vadd.f32 %v507, %v584
        %589 = vset.pattern.permute.xlu0 0
        %590 = vperm.xlu0 %589, %v293
        %v591 = vpop.permute.xlu0 %590
        %v593 = vadd.f32 %v587, %v591
        %v594 = vxor.u32 %v291, 2147483648
        %v595 = vmul.f32 %v594, 1.442695
        %v596 = vpow.pop %v595
        %v597 = vadd.f32 %v596, 1.0
        %v598 = vrcp.pop %v597
        %v599 = vmul.f32 1.0, %v598
        %v600 = vmul.f32 %v291, %v599
        %v601 = vld [vmem:[%s5] sm:$0xff]
        %602 = vrot.lane.b32.xlu0 %v293, 123
        %v603 = vpop.permute.xlu0 %602
        %vm605 = vcmask 64512
        %v607 = vsel %vm605, %v601, 0
        %609 = vmatprep.subr.mxu0 0.0
        %610 = vmatpush1.msra.mxu0 0.0
        %611 = vmatprep.subr.mxu0 0.0
        %612 = vmatpush1.msra.mxu0 0.0
        %613 = vmatprep.subr.mxu0 0.0
        %614 = vmatpush1.msra.mxu0 0.0
        %615 = vmatprep.subr.mxu0 0.0
        %616 = vmatpush1.msra.mxu0 0.0
        %617 = vmatprep.subr.mxu0 0.0
        %618 = vmatpush1.msra.mxu0 0.0
        %619 = vmatprep.subr.mxu0 0.0
        %620 = vmatpush1.msra.mxu0 0.0
        %621 = vmatprep.subr.mxu0 0.0
        %622 = vmatpush1.msra.mxu0 0.0
        %623 = vmatprep.subr.mxu0 0.0
        %624 = vmatpush1.msra.mxu0 0.0
        %625 = vmatprep.subr.mxu0 0.0
        %626 = vmatpush1.msra.mxu0 0.0
        %627 = vmatprep.subr.mxu0 0.0
        %628 = vmatpush1.msra.mxu0 0.0
        %629 = vmatprep.subr.mxu0 0.0
        %630 = vmatpush1.msra.mxu0 0.0
        %631 = vmatprep.subr.mxu0 0.0
        %632 = vmatpush1.msra.mxu0 0.0
        %633 = vmatprep.subr.mxu0 0.0
        %634 = vmatpush1.msra.mxu0 0.0
        %635 = vmatprep.subr.mxu0 0.0
        %636 = vmatpush1.msra.mxu0 0.0
        %637 = vmatprep.subr.mxu0 0.0
        %638 = vmatpush1.msra.mxu0 0.0
        %639 = vmatprep.subr.mxu0 0.0
        %640 = vmatpush1.msra.mxu0 %v600
        %641 = vmatprep.subr.mxu0 0.0
        %642 = vmatpush2.msra.mxu0 0.0
        %643 = vmatprep.subr.mxu0 0.0
        %644 = vmatpush2.msra.mxu0 0.0
        %645 = vmatprep.subr.mxu0 0.0
        %646 = vmatpush2.msra.mxu0 0.0
        %647 = vmatprep.subr.mxu0 0.0
        %648 = vmatpush2.msra.mxu0 0.0
        %649 = vmatprep.subr.mxu0 0.0
        %650 = vmatpush2.msra.mxu0 0.0
        %651 = vmatprep.subr.mxu0 0.0
        %652 = vmatpush2.msra.mxu0 0.0
        %653 = vmatprep.subr.mxu0 0.0
        %654 = vmatpush2.msra.mxu0 0.0
        %655 = vmatprep.subr.mxu0 0.0
        %656 = vmatpush2.msra.mxu0 0.0
        %657 = vmatprep.subr.mxu0 0.0
        %658 = vmatpush2.msra.mxu0 0.0
        %659 = vmatprep.subr.mxu0 0.0
        %660 = vmatpush2.msra.mxu0 0.0
        %661 = vmatprep.subr.mxu0 0.0
        %662 = vmatpush2.msra.mxu0 0.0
        %663 = vmatprep.subr.mxu0 0.0
        %664 = vmatpush2.msra.mxu0 0.0
        %665 = vmatprep.subr.mxu0 0.0
        %666 = vmatpush2.msra.mxu0 0.0
        %667 = vmatprep.subr.mxu0 0.0
        %668 = vmatpush2.msra.mxu0 0.0
        %669 = vmatprep.subr.mxu0 0.0
        %670 = vmatpush2.msra.mxu0 0.0
        %671 = vmatprep.subr.mxu0 0.0
        %672 = vmatpush2.msra.mxu0 0.0
        %673 = vmatprep.mubr.f32.mxu0 0.0
        %674 = vmatmul.mubr.f32.gmra.mxu0 %v607
        %v675 = vpop.f32.mrf.mxu0
        %v676 = vadd.f32 %v603, %v675
        %v677 = vpop.f32.mrf.mxu0
        %678 = vdwg.mxu0
        %s679 = scalar_lea.vmem %s5, 8
        %v680 = vld [vmem:[%s679] sm:$0xff]
        %681 = vrot.lane.b32.xlu0 %v293, 122
        %v682 = vpop.permute.xlu0 %681
        %v685 = vsel %vm605, %v680, 0
        %687 = vmatprep.subr.mxu0 0.0
        %688 = vmatpush1.msra.mxu0 0.0
        %689 = vmatprep.subr.mxu0 0.0
        %690 = vmatpush1.msra.mxu0 0.0
        %691 = vmatprep.subr.mxu0 0.0
        %692 = vmatpush1.msra.mxu0 0.0
        %693 = vmatprep.subr.mxu0 0.0
        %694 = vmatpush1.msra.mxu0 0.0
        %695 = vmatprep.subr.mxu0 0.0
        %696 = vmatpush1.msra.mxu0 0.0
        %697 = vmatprep.subr.mxu0 0.0
        %698 = vmatpush1.msra.mxu0 0.0
        %699 = vmatprep.subr.mxu0 0.0
        %700 = vmatpush1.msra.mxu0 0.0
        %701 = vmatprep.subr.mxu0 0.0
        %702 = vmatpush1.msra.mxu0 0.0
        %703 = vmatprep.subr.mxu0 0.0
        %704 = vmatpush1.msra.mxu0 0.0
        %705 = vmatprep.subr.mxu0 0.0
        %706 = vmatpush1.msra.mxu0 0.0
        %707 = vmatprep.subr.mxu0 0.0
        %708 = vmatpush1.msra.mxu0 0.0
        %709 = vmatprep.subr.mxu0 0.0
        %710 = vmatpush1.msra.mxu0 0.0
        %711 = vmatprep.subr.mxu0 0.0
        %712 = vmatpush1.msra.mxu0 0.0
        %713 = vmatprep.subr.mxu0 0.0
        %714 = vmatpush1.msra.mxu0 0.0
        %715 = vmatprep.subr.mxu0 0.0
        %716 = vmatpush1.msra.mxu0 0.0
        %717 = vmatprep.subr.mxu0 0.0
        %718 = vmatpush1.msra.mxu0 %v600
        %719 = vmatprep.subr.mxu0 0.0
        %720 = vmatpush2.msra.mxu0 0.0
        %721 = vmatprep.subr.mxu0 0.0
        %722 = vmatpush2.msra.mxu0 0.0
        %723 = vmatprep.subr.mxu0 0.0
        %724 = vmatpush2.msra.mxu0 0.0
        %725 = vmatprep.subr.mxu0 0.0
        %726 = vmatpush2.msra.mxu0 0.0
        %727 = vmatprep.subr.mxu0 0.0
        %728 = vmatpush2.msra.mxu0 0.0
        %729 = vmatprep.subr.mxu0 0.0
        %730 = vmatpush2.msra.mxu0 0.0
        %731 = vmatprep.subr.mxu0 0.0
        %732 = vmatpush2.msra.mxu0 0.0
        %733 = vmatprep.subr.mxu0 0.0
        %734 = vmatpush2.msra.mxu0 0.0
        %735 = vmatprep.subr.mxu0 0.0
        %736 = vmatpush2.msra.mxu0 0.0
        %737 = vmatprep.subr.mxu0 0.0
        %738 = vmatpush2.msra.mxu0 0.0
        %739 = vmatprep.subr.mxu0 0.0
        %740 = vmatpush2.msra.mxu0 0.0
        %741 = vmatprep.subr.mxu0 0.0
        %742 = vmatpush2.msra.mxu0 0.0
        %743 = vmatprep.subr.mxu0 0.0
        %744 = vmatpush2.msra.mxu0 0.0
        %745 = vmatprep.subr.mxu0 0.0
        %746 = vmatpush2.msra.mxu0 0.0
        %747 = vmatprep.subr.mxu0 0.0
        %748 = vmatpush2.msra.mxu0 0.0
        %749 = vmatprep.subr.mxu0 0.0
        %750 = vmatpush2.msra.mxu0 0.0
        %751 = vmatprep.mubr.f32.mxu0 0.0
        %752 = vmatmul.mubr.f32.gmra.mxu0 %v685
        %v753 = vpop.f32.mrf.mxu0
        %v754 = vadd.f32 %v682, %v753
        %v755 = vpop.f32.mrf.mxu0
        %756 = vdwg.mxu0
        %757 = vadd.xlane.f32.xlu0 %v593
        %v758 = vpop.xlane.xlu0 %757
        %v759 = vrot.slane %v758, 4
        %v760 = vadd.f32 %v758, %v759
        %v761 = vrot.slane %v760, 2
        %v762 = vadd.f32 %v760, %v761
        %v763 = vrot.slane %v762, 1
        %v764 = vadd.f32 %v762, %v763
        %v765 = vmul.f32 %v764, 0.0009765625
        %v766 = vsub.f32 %v593, %v765
        %v767 = vmul.f32 %v766, %v766
        %768 = vadd.xlane.f32.xlu0 %v767
        %v769 = vpop.xlane.xlu0 %768
        %v770 = vrot.slane %v769, 4
        %v771 = vadd.f32 %v769, %v770
        %v772 = vrot.slane %v771, 2
        %v773 = vadd.f32 %v771, %v772
        %v774 = vrot.slane %v773, 1
        %v775 = vadd.f32 %v773, %v774
        %v776 = vmul.f32 %v775, 0.0009765625
        %v777 = vadd.f32 %v776, 1e-05
        %v778 = vrsqrt.pop %v777
        %v779 = vmul.f32 %v778, %v293
        %v780 = vadd.f32 %v676, 1.0
        %782 = vrot.lane.b32.xlu0 %v780, 1
        %v783 = vpop.permute.xlu0 %782
        %v785 = vmul.f32 %v779, %v783
        %786 = vrot.lane.b32.xlu0 %v780, 2
        %v787 = vpop.permute.xlu0 %786
        %v789 = vmul.f32 %v293, %v787
        %791 = vrot.lane.b32.xlu0 %v754, 2
        %v792 = vpop.permute.xlu0 %791
        %v794 = vadd.f32 %v789, %v792
        %796 = vset.pattern.permute.xlu0 1
        %797 = vperm.xlu0 %796, %v785
        %v798 = vpop.permute.xlu0 %797
        %v800 = vmul.f32 %v766, %v798
        %802 = vset.pattern.permute.xlu0 2
        %803 = vperm.xlu0 %802, %v794
        %v804 = vpop.permute.xlu0 %803
        %v806 = vadd.f32 %v800, %v804
        %v807 = vxor.u32 %v806, 2147483648
        %v808 = vmul.f32 %v807, 1.442695
        %v809 = vpow.pop %v808
        %v810 = vadd.f32 %v809, 1.0
        %v811 = vrcp.pop %v810
        %v812 = vmul.f32 1.0, %v811
        %v813 = vmul.f32 %v806, %v812
        %814 = vrot.lane.b32.xlu0 %v813, 1
        %v815 = vpop.permute.xlu0 %814
        %v816 = vsel %vm349, %v815, 0.0
        %817 = vrot.lane.b32.xlu0 %v813, 127
        %v818 = vpop.permute.xlu0 %817
        %v819 = vsel %vm354, %v818, 0.0
        %820 = vrot.lane.b32.xlu0 %v294, 108
        %v821 = vpop.permute.xlu0 %820
        %v822 = vsel %vm605, %v821, 0
        %824 = vmatprep.subr.mxu0 0.0
        %825 = vmatpush1.msra.mxu0 0.0
        %826 = vmatprep.subr.mxu0 0.0
        %827 = vmatpush1.msra.mxu0 0.0
        %828 = vmatprep.subr.mxu0 0.0
        %829 = vmatpush1.msra.mxu0 0.0
        %830 = vmatprep.subr.mxu0 0.0
        %831 = vmatpush1.msra.mxu0 0.0
        %832 = vmatprep.subr.mxu0 0.0
        %833 = vmatpush1.msra.mxu0 0.0
        %834 = vmatprep.subr.mxu0 0.0
        %835 = vmatpush1.msra.mxu0 0.0
        %836 = vmatprep.subr.mxu0 0.0
        %837 = vmatpush1.msra.mxu0 0.0
        %838 = vmatprep.subr.mxu0 0.0
        %839 = vmatpush1.msra.mxu0 0.0
        %840 = vmatprep.subr.mxu0 0.0
        %841 = vmatpush1.msra.mxu0 0.0
        %842 = vmatprep.subr.mxu0 0.0
        %843 = vmatpush1.msra.mxu0 0.0
        %844 = vmatprep.subr.mxu0 0.0
        %845 = vmatpush1.msra.mxu0 0.0
        %846 = vmatprep.subr.mxu0 0.0
        %847 = vmatpush1.msra.mxu0 0.0
        %848 = vmatprep.subr.mxu0 0.0
        %849 = vmatpush1.msra.mxu0 0.0
        %850 = vmatprep.subr.mxu0 0.0
        %851 = vmatpush1.msra.mxu0 0.0
        %852 = vmatprep.subr.mxu0 0.0
        %853 = vmatpush1.msra.mxu0 0.0
        %854 = vmatprep.subr.mxu0 0.0
        %855 = vmatpush1.msra.mxu0 %v813
        %856 = vmatprep.subr.mxu0 0.0
        %857 = vmatpush2.msra.mxu0 0.0
        %858 = vmatprep.subr.mxu0 0.0
        %859 = vmatpush2.msra.mxu0 0.0
        %860 = vmatprep.subr.mxu0 0.0
        %861 = vmatpush2.msra.mxu0 0.0
        %862 = vmatprep.subr.mxu0 0.0
        %863 = vmatpush2.msra.mxu0 0.0
        %864 = vmatprep.subr.mxu0 0.0
        %865 = vmatpush2.msra.mxu0 0.0
        %866 = vmatprep.subr.mxu0 0.0
        %867 = vmatpush2.msra.mxu0 0.0
        %868 = vmatprep.subr.mxu0 0.0
        %869 = vmatpush2.msra.mxu0 0.0
        %870 = vmatprep.subr.mxu0 0.0
        %871 = vmatpush2.msra.mxu0 0.0
        %872 = vmatprep.subr.mxu0 0.0
        %873 = vmatpush2.msra.mxu0 0.0
        %874 = vmatprep.subr.mxu0 0.0
        %875 = vmatpush2.msra.mxu0 0.0
        %876 = vmatprep.subr.mxu0 0.0
        %877 = vmatpush2.msra.mxu0 0.0
        %878 = vmatprep.subr.mxu0 0.0
        %879 = vmatpush2.msra.mxu0 0.0
        %880 = vmatprep.subr.mxu0 0.0
        %881 = vmatpush2.msra.mxu0 0.0
        %882 = vmatprep.subr.mxu0 0.0
        %883 = vmatpush2.msra.mxu0 0.0
        %884 = vmatprep.subr.mxu0 0.0
        %885 = vmatpush2.msra.mxu0 0.0
        %886 = vmatprep.subr.mxu0 0.0
        %887 = vmatpush2.msra.mxu0 0.0
        %888 = vmatprep.mubr.f32.mxu0 0.0
        %889 = vmatmul.mubr.f32.gmra.mxu0 %v822
        %v890 = vpop.f32.mrf.mxu0
        %v891 = vadd.f32 0.0, %v890
        %v892 = vpop.f32.mrf.mxu0
        %893 = vdwg.mxu0
        %894 = vrot.lane.b32.xlu0 %v294, 116
        %v895 = vpop.permute.xlu0 %894
        %v896 = vsel %vm605, %v895, 0
        %898 = vmatprep.subr.mxu0 0.0
        %899 = vmatpush1.msra.mxu0 0.0
        %900 = vmatprep.subr.mxu0 0.0
        %901 = vmatpush1.msra.mxu0 0.0
        %902 = vmatprep.subr.mxu0 0.0
        %903 = vmatpush1.msra.mxu0 0.0
        %904 = vmatprep.subr.mxu0 0.0
        %905 = vmatpush1.msra.mxu0 0.0
        %906 = vmatprep.subr.mxu0 0.0
        %907 = vmatpush1.msra.mxu0 0.0
        %908 = vmatprep.subr.mxu0 0.0
        %909 = vmatpush1.msra.mxu0 0.0
        %910 = vmatprep.subr.mxu0 0.0
        %911 = vmatpush1.msra.mxu0 0.0
        %912 = vmatprep.subr.mxu0 0.0
        %913 = vmatpush1.msra.mxu0 0.0
        %914 = vmatprep.subr.mxu0 0.0
        %915 = vmatpush1.msra.mxu0 0.0
        %916 = vmatprep.subr.mxu0 0.0
        %917 = vmatpush1.msra.mxu0 0.0
        %918 = vmatprep.subr.mxu0 0.0
        %919 = vmatpush1.msra.mxu0 0.0
        %920 = vmatprep.subr.mxu0 0.0
        %921 = vmatpush1.msra.mxu0 0.0
        %922 = vmatprep.subr.mxu0 0.0
        %923 = vmatpush1.msra.mxu0 0.0
        %924 = vmatprep.subr.mxu0 0.0
        %925 = vmatpush1.msra.mxu0 0.0
        %926 = vmatprep.subr.mxu0 0.0
        %927 = vmatpush1.msra.mxu0 0.0
        %928 = vmatprep.subr.mxu0 0.0
        %929 = vmatpush1.msra.mxu0 %v816
        %930 = vmatprep.subr.mxu0 0.0
        %931 = vmatpush2.msra.mxu0 0.0
        %932 = vmatprep.subr.mxu0 0.0
        %933 = vmatpush2.msra.mxu0 0.0
        %934 = vmatprep.subr.mxu0 0.0
        %935 = vmatpush2.msra.mxu0 0.0
        %936 = vmatprep.subr.mxu0 0.0
        %937 = vmatpush2.msra.mxu0 0.0
        %938 = vmatprep.subr.mxu0 0.0
        %939 = vmatpush2.msra.mxu0 0.0
        %940 = vmatprep.subr.mxu0 0.0
        %941 = vmatpush2.msra.mxu0 0.0
        %942 = vmatprep.subr.mxu0 0.0
        %943 = vmatpush2.msra.mxu0 0.0
        %944 = vmatprep.subr.mxu0 0.0
        %945 = vmatpush2.msra.mxu0 0.0
        %946 = vmatprep.subr.mxu0 0.0
        %947 = vmatpush2.msra.mxu0 0.0
        %948 = vmatprep.subr.mxu0 0.0
        %949 = vmatpush2.msra.mxu0 0.0
        %950 = vmatprep.subr.mxu0 0.0
        %951 = vmatpush2.msra.mxu0 0.0
        %952 = vmatprep.subr.mxu0 0.0
        %953 = vmatpush2.msra.mxu0 0.0
        %954 = vmatprep.subr.mxu0 0.0
        %955 = vmatpush2.msra.mxu0 0.0
        %956 = vmatprep.subr.mxu0 0.0
        %957 = vmatpush2.msra.mxu0 0.0
        %958 = vmatprep.subr.mxu0 0.0
        %959 = vmatpush2.msra.mxu0 0.0
        %960 = vmatprep.subr.mxu0 0.0
        %961 = vmatpush2.msra.mxu0 0.0
        %962 = vmatprep.mubr.f32.mxu0 0.0
        %963 = vmatmul.mubr.f32.gmra.mxu0 %v896
        %v964 = vpop.f32.mrf.mxu0
        %v965 = vadd.f32 %v891, %v964
        %v966 = vpop.f32.mrf.mxu0
        %967 = vdwg.mxu0
        %968 = vrot.lane.b32.xlu0 %v294, 100
        %v969 = vpop.permute.xlu0 %968
        %v970 = vsel %vm605, %v969, 0
        %972 = vmatprep.subr.mxu0 0.0
        %973 = vmatpush1.msra.mxu0 0.0
        %974 = vmatprep.subr.mxu0 0.0
        %975 = vmatpush1.msra.mxu0 0.0
        %976 = vmatprep.subr.mxu0 0.0
        %977 = vmatpush1.msra.mxu0 0.0
        %978 = vmatprep.subr.mxu0 0.0
        %979 = vmatpush1.msra.mxu0 0.0
        %980 = vmatprep.subr.mxu0 0.0
        %981 = vmatpush1.msra.mxu0 0.0
        %982 = vmatprep.subr.mxu0 0.0
        %983 = vmatpush1.msra.mxu0 0.0
        %984 = vmatprep.subr.mxu0 0.0
        %985 = vmatpush1.msra.mxu0 0.0
        %986 = vmatprep.subr.mxu0 0.0
        %987 = vmatpush1.msra.mxu0 0.0
        %988 = vmatprep.subr.mxu0 0.0
        %989 = vmatpush1.msra.mxu0 0.0
        %990 = vmatprep.subr.mxu0 0.0
        %991 = vmatpush1.msra.mxu0 0.0
        %992 = vmatprep.subr.mxu0 0.0
        %993 = vmatpush1.msra.mxu0 0.0
        %994 = vmatprep.subr.mxu0 0.0
        %995 = vmatpush1.msra.mxu0 0.0
        %996 = vmatprep.subr.mxu0 0.0
        %997 = vmatpush1.msra.mxu0 0.0
        %998 = vmatprep.subr.mxu0 0.0
        %999 = vmatpush1.msra.mxu0 0.0
        %1000 = vmatprep.subr.mxu0 0.0
        %1001 = vmatpush1.msra.mxu0 0.0
        %1002 = vmatprep.subr.mxu0 0.0
        %1003 = vmatpush1.msra.mxu0 %v819
        %1004 = vmatprep.subr.mxu0 0.0
        %1005 = vmatpush2.msra.mxu0 0.0
        %1006 = vmatprep.subr.mxu0 0.0
        %1007 = vmatpush2.msra.mxu0 0.0
        %1008 = vmatprep.subr.mxu0 0.0
        %1009 = vmatpush2.msra.mxu0 0.0
        %1010 = vmatprep.subr.mxu0 0.0
        %1011 = vmatpush2.msra.mxu0 0.0
        %1012 = vmatprep.subr.mxu0 0.0
        %1013 = vmatpush2.msra.mxu0 0.0
        %1014 = vmatprep.subr.mxu0 0.0
        %1015 = vmatpush2.msra.mxu0 0.0
        %1016 = vmatprep.subr.mxu0 0.0
        %1017 = vmatpush2.msra.mxu0 0.0
        %1018 = vmatprep.subr.mxu0 0.0
        %1019 = vmatpush2.msra.mxu0 0.0
        %1020 = vmatprep.subr.mxu0 0.0
        %1021 = vmatpush2.msra.mxu0 0.0
        %1022 = vmatprep.subr.mxu0 0.0
        %1023 = vmatpush2.msra.mxu0 0.0
        %1024 = vmatprep.subr.mxu0 0.0
        %1025 = vmatpush2.msra.mxu0 0.0
        %1026 = vmatprep.subr.mxu0 0.0
        %1027 = vmatpush2.msra.mxu0 0.0
        %1028 = vmatprep.subr.mxu0 0.0
        %1029 = vmatpush2.msra.mxu0 0.0
        %1030 = vmatprep.subr.mxu0 0.0
        %1031 = vmatpush2.msra.mxu0 0.0
        %1032 = vmatprep.subr.mxu0 0.0
        %1033 = vmatpush2.msra.mxu0 0.0
        %1034 = vmatprep.subr.mxu0 0.0
        %1035 = vmatpush2.msra.mxu0 0.0
        %1036 = vmatprep.mubr.f32.mxu0 0.0
        %1037 = vmatmul.mubr.f32.gmra.mxu0 %v970
        %v1038 = vpop.f32.mrf.mxu0
        %v1039 = vadd.f32 0.0, %v1038
        %v1040 = vpop.f32.mrf.mxu0
        %1041 = vdwg.mxu0
        %v1042 = vadd.f32 %v965, %v1039
        %1043 = vset.pattern.permute.xlu0 3
        %1044 = vperm.xlu0 %1043, %v293
        %v1045 = vpop.permute.xlu0 %1044
        %v1047 = vadd.f32 %v1042, %v1045
        %1048 = vset.pattern.permute.xlu0 4
        %1049 = vperm.xlu0 %1048, %v293
        %v1050 = vpop.permute.xlu0 %1049
        %1052 = vrot.lane.b32.xlu0 %v294, 92
        %v1053 = vpop.permute.xlu0 %1052
        %v1054 = vsel %vm359, %v1053, 0
        %v1057 = vsel %vm299, %v290, 0
        %1059 = vmatprep.subr.mxu0 0.0
        %1060 = vmatpush1.msra.mxu0 0.0
        %1061 = vmatprep.subr.mxu0 0.0
        %1062 = vmatpush1.msra.mxu0 0.0
        %1063 = vmatprep.subr.mxu0 0.0
        %1064 = vmatpush1.msra.mxu0 0.0
        %1065 = vmatprep.subr.mxu0 0.0
        %1066 = vmatpush1.msra.mxu0 0.0
        %1067 = vmatprep.subr.mxu0 0.0
        %1068 = vmatpush1.msra.mxu0 0.0
        %1069 = vmatprep.subr.mxu0 0.0
        %1070 = vmatpush1.msra.mxu0 0.0
        %1071 = vmatprep.subr.mxu0 0.0
        %1072 = vmatpush1.msra.mxu0 0.0
        %1073 = vmatprep.subr.mxu0 0.0
        %1074 = vmatpush1.msra.mxu0 0.0
        %1075 = vmatprep.subr.mxu0 0.0
        %1076 = vmatpush1.msra.mxu0 0.0
        %1077 = vmatprep.subr.mxu0 0.0
        %1078 = vmatpush1.msra.mxu0 0.0
        %1079 = vmatprep.subr.mxu0 0.0
        %1080 = vmatpush1.msra.mxu0 0.0
        %1081 = vmatprep.subr.mxu0 0.0
        %1082 = vmatpush1.msra.mxu0 0.0
        %1083 = vmatprep.subr.mxu0 0.0
        %1084 = vmatpush1.msra.mxu0 0.0
        %1085 = vmatprep.subr.mxu0 0.0
        %1086 = vmatpush1.msra.mxu0 0.0
        %1087 = vmatprep.subr.mxu0 0.0
        %1088 = vmatpush1.msra.mxu0 0.0
        %1089 = vmatprep.subr.mxu0 0.0
        %1090 = vmatpush1.msra.mxu0 %v1057
        %1091 = vmatprep.subr.mxu0 0.0
        %1092 = vmatpush2.msra.mxu0 0.0
        %1093 = vmatprep.subr.mxu0 0.0
        %1094 = vmatpush2.msra.mxu0 0.0
        %1095 = vmatprep.subr.mxu0 0.0
        %1096 = vmatpush2.msra.mxu0 0.0
        %1097 = vmatprep.subr.mxu0 0.0
        %1098 = vmatpush2.msra.mxu0 0.0
        %1099 = vmatprep.subr.mxu0 0.0
        %1100 = vmatpush2.msra.mxu0 0.0
        %1101 = vmatprep.subr.mxu0 0.0
        %1102 = vmatpush2.msra.mxu0 0.0
        %1103 = vmatprep.subr.mxu0 0.0
        %1104 = vmatpush2.msra.mxu0 0.0
        %1105 = vmatprep.subr.mxu0 0.0
        %1106 = vmatpush2.msra.mxu0 0.0
        %1107 = vmatprep.subr.mxu0 0.0
        %1108 = vmatpush2.msra.mxu0 0.0
        %1109 = vmatprep.subr.mxu0 0.0
        %1110 = vmatpush2.msra.mxu0 0.0
        %1111 = vmatprep.subr.mxu0 0.0
        %1112 = vmatpush2.msra.mxu0 0.0
        %1113 = vmatprep.subr.mxu0 0.0
        %1114 = vmatpush2.msra.mxu0 0.0
        %1115 = vmatprep.subr.mxu0 0.0
        %1116 = vmatpush2.msra.mxu0 0.0
        %1117 = vmatprep.subr.mxu0 0.0
        %1118 = vmatpush2.msra.mxu0 0.0
        %1119 = vmatprep.subr.mxu0 0.0
        %1120 = vmatpush2.msra.mxu0 0.0
        %1121 = vmatprep.subr.mxu0 0.0
        %1122 = vmatpush2.msra.mxu0 0.0
        %1123 = vmatprep.mubr.f32.mxu0 0.0
        %1124 = vmatmul.mubr.f32.gmra.mxu0 %v1054
        %v1125 = vpop.f32.mrf.mxu0
        %v1126 = vadd.f32 %v1050, %v1125
        %v1127 = vpop.f32.mrf.mxu0
        %1128 = vdwg.mxu0
        %v1129 = vadd.f32 %v1047, %v1126
        %1130 = vst [vmem:[%s281] sm:$0xff] %v1129
        %s1131 = sand.u32 %s166, 1
        %s1132 = scalar_lea.sflag [#allocation4], %s1131
        %s1133 = sand.u32 %s166, 1
        %s1134 = smul.addr %s1133, 8
        %s1135 = scalar_lea.vmem [#allocation7], %s1134
        // Predicated region
        $region53: #{tpu_custom_call.1} parent=43 // pred_check
          %p1136 = pneg %p176
        $region54: #{tpu_custom_call.1} parent=43 // pred_check_branch
          %1138 = sbr.rel (%p1136) target = $region56
        $region55: #{tpu_custom_call.1} parent=43 // pred_region
          %s1140 = ssub.s32 128, 128
          %1141 = vsyncadd %s1132, %s1140
          %s1142 = smul.addr %s22, 128
          %s1143 = scalar_lea.hbm %s6, %s1142
          %s1145 = sshll.u32 %s1135, 4
          %s1146 = int_to_ptr.vmem [resolvable:$true] %s1145
          %1148 = dma.vmem_to_hbm [thread:$0]  %s1146, 128, %s1143, %s1132
        $region56: #{tpu_custom_call.1} parent=43 // pred_fallthru
          _
      $region44: #{tpu_custom_call.1} parent=5 // pred_fallthru
        _
      %p1149 = scmp.le.s32.totalorder 2, %s17
      // Predicated region
      $region57: #{tpu_custom_call.1} parent=5 // pred_check
        %p1150 = pneg %p1149
      $region58: #{tpu_custom_call.1} parent=5 // pred_check_branch
        %1152 = sbr.rel (%p1150) target = $region60
      $region59: #{tpu_custom_call.1} parent=5 // pred_region
        %s1153 = ssub.s32 %s17, 2
        // Predicated region
        $region61: #{tpu_custom_call.1} parent=59 // pred_check
          %p1154 = pneg %p182
        $region62: #{tpu_custom_call.1} parent=59 // pred_check_branch
          %1156 = sbr.rel (%p1154) target = $region64
        $region63: #{tpu_custom_call.1} parent=59 // pred_region
          %s1157 = sand.u32 %s167, 1
          %s1158 = scalar_lea.sflag [#allocation4], %s1157
          %s1159 = sand.u32 %s167, 1
          %s1160 = smul.addr %s1159, 8
          %s1161 = scalar_lea.vmem [#allocation7], %s1160
          %1162 = dma.done %s1158, 128
        $region64: #{tpu_custom_call.1} parent=59 // pred_fallthru
          _
      $region60: #{tpu_custom_call.1} parent=5 // pred_fallthru
        _
    $region6: #{tpu_custom_call.1} parent=1 // loop_footer
      %s21 = sadd.s32 1, %s17
    $region7: #{tpu_custom_call.1} parent=1 // loop_footer_branch
      %16 = sbr.rel target = $region3
    $region8: #{tpu_custom_call.1} parent=1 // loop_exit
      _
    %1163 = vsyncpa [#allocation3], 1
    %s1164 = scalar_lea.sflag [#allocation3], 1
    %1165 = vsyncpa %s1164, 1
    %1166 = vsyncpa [#allocation6], 1
    %1167 = vsyncpa [#allocation4], 1
    %s1168 = scalar_lea.sflag [#allocation4], 1
    %1169 = vsyncpa %s1168, 1

</llo_original>
